<compile_context>
chip_gen: v5e
topology: v5e:2x2
jax: 0.10.0
libtpu: 0.0.40
codegen_flags: <defaults>
</compile_context>

<pallas_src>
import jax
import jax.numpy as jnp
from jax.experimental import pallas as pl
from jax.experimental.pallas import tpu as pltpu


def _label_classifier_kernel(xl_ref, xr_ref, wl_ref, wr_ref, rhsl_ref, rhsr_ref,
                             wbil_ref, bias_ref, rel_ref, logrel_ref):
    kp = bias_ref.shape[1]                 # padded class count (multiple of 128)
    mm_dtype = wl_ref.dtype                # bf16 on deployment, f32 for parity runs

    # --- labelspace projections (two tiny MXU pushes) + ELU (f32 VPU/EUP) ---
    hl32 = jnp.dot(xl_ref[...], wl_ref[...], preferred_element_type=jnp.float32)
    hr32 = jnp.dot(xr_ref[...], wr_ref[...], preferred_element_type=jnp.float32)
    # F.elu(alpha=1); exp(x)-1 differs from expm1 by <=~1.2e-7 near 0 (negligible).
    hl32 = jnp.where(hl32 > 0, hl32, jnp.exp(hl32) - 1.0)
    hr32 = jnp.where(hr32 > 0, hr32, jnp.exp(hr32) - 1.0)
    # TODO(synk): training-mode dropout (p=0.5) between ELU and the heads is not
    # implemented; this kernel is the inference path (dropout == identity).
    hl = hl32.astype(mm_dtype)                                       # (TB, H)
    hr = hr32.astype(mm_dtype)

    # --- fused [class-weight | outer-product-expansion] matmul per side ---
    #   ol[:, :kp]  = hl @ Vl_pad          (class-weight linear, left)
    #   ol[:, kp:]  = hl replicated so ol[b, kp + i*H + j] = hl[b, i]
    #   (and symmetrically for the right side with hr[b, j]).
    ol = jnp.dot(hl, rhsl_ref[...], preferred_element_type=jnp.float32)  # (TB, Kp+H*H)
    orr = jnp.dot(hr, rhsr_ref[...], preferred_element_type=jnp.float32)

    lin = ol[:, :kp] + orr[:, :kp]                                   # (TB, Kp)
    p = (ol[:, kp:] * orr[:, kp:]).astype(mm_dtype)                  # (TB, H*H), 128-aligned slices

    # --- bilinear form as ONE lane-dense MXU matmul over the flattened
    #     outer product: bil[b,k] = sum_{i,j} hl[b,i] * W[k,i,j] * hr[b,j] ---
    bil = jnp.dot(p, wbil_ref[...], preferred_element_type=jnp.float32)  # (TB, Kp)

    # padded class columns get bias = -1e30 -> ignored by softmax, sliced off later
    out = bil + lin + bias_ref[...]                                  # (TB, Kp) logits (f32)

    # --- softmax & log_softmax sharing one max / exp / sum pass ---
    m = jnp.max(out, axis=1, keepdims=True)
    e = jnp.exp(out - m)
    s = jnp.sum(e, axis=1, keepdims=True)
    inv = pl.reciprocal(s, approx=True)          # EUP slot (nearly free)
    inv = inv * (2.0 - s * inv)                  # one Newton step -> ~f32 accuracy
    rel_ref[...] = e * inv
    logrel_ref[...] = out - (m + jnp.log(s))     # == log_softmax(out + 1e-6)


def prepare_label_classifier_params(params, mm_dtype=jnp.bfloat16):
    """One-time host-side repacking of PyTorch-layout weights for the kernel.

    mm_dtype=bfloat16 halves weight/activation DMA bytes and uses the native
    bf16 MXU path on v5e/v6e/v7x (all elementwise/transcendental math stays f32
    in-kernel). Use mm_dtype=float32 only if tight parity with an f32 torch
    reference is required.
    """
    wl_t, wr_t = params["wl_t"], params["wr_t"]            # (D, H) each
    vl_t, vr_t = params["vl_t"], params["vr_t"]            # (H, K) each
    w_bil = params["w_bilinear"]                           # (K, H, H) = W[k, i, j]
    b_bil = params["b_bilinear"].reshape(1, -1)            # (1, K)
    D, H = wl_t.shape
    K = vl_t.shape[1]
    HH = H * H
    Kp = max(128, ((K + 127) // 128) * 128)                # pad classes to 128 lanes

    # 1) class-weight linears, zero-padded to Kp columns.
    vl_p = jnp.zeros((H, Kp), jnp.float32).at[:, :K].set(vl_t)
    vr_p = jnp.zeros((H, Kp), jnp.float32).at[:, :K].set(vr_t)

    # 2) 0/1 expansion matrices building the flattened outer product:
    #    (hl @ r_rep)[b, i*H+j] = hl[b, i],  (hr @ r_til)[b, i*H+j] = hr[b, j].
    eye = jnp.eye(H, dtype=jnp.float32)
    r_rep = jnp.repeat(eye, H, axis=1)                     # (H, H*H)
    r_til = jnp.tile(eye, (1, H))                          # (H, H*H)

    # 3) fuse class-weight + expansion into one RHS per side (one MXU push each).
    rhs_l = jnp.concatenate([vl_p, r_rep], axis=1)         # (H, Kp + H*H)
    rhs_r = jnp.concatenate([vr_p, r_til], axis=1)

    # 4) bilinear weight flattened so the whole bilinear form is one matmul:
    #    w_bil_mat[i*H+j, k] = W[k, i, j]; classes zero-padded to Kp.
    w_bil_mat = jnp.transpose(w_bil, (1, 2, 0)).reshape(HH, K)
    w_bil_p = jnp.zeros((HH, Kp), jnp.float32).at[:, :K].set(w_bil_mat)

    # 5) bias with padded classes at -1e30 so softmax/log_softmax ignore them.
    bias = jnp.full((1, Kp), -1e30, jnp.float32).at[:, :K].set(b_bil)

    return {
        "wl_t": wl_t.astype(mm_dtype),
        "wr_t": wr_t.astype(mm_dtype),
        "rhs_l": rhs_l.astype(mm_dtype),
        "rhs_r": rhs_r.astype(mm_dtype),
        "w_bil_mat": w_bil_p.astype(mm_dtype),
        "bias": bias,
        "num_classes": K,
        "hidden": H,
    }


def label_classifier(input_left, input_right, packed, *, block_b=128):
    """Forward pass: grid over the batch, everything else resident in VMEM."""
    assert block_b % 8 == 0
    B, D = input_left.shape
    K = packed["num_classes"]
    H = packed["hidden"]
    HH = H * H
    Kp = packed["bias"].shape[1]
    mm_dtype = packed["wl_t"].dtype

    TB = min(block_b, pl.cdiv(B, 8) * 8)                   # batch tile (multiple of 8)
    nb = pl.cdiv(B, TB)
    Bp = nb * TB

    xl = input_left.astype(mm_dtype)
    xr = input_right.astype(mm_dtype)
    if Bp != B:
        xl = jnp.pad(xl, ((0, Bp - B), (0, 0)))
        xr = jnp.pad(xr, ((0, Bp - B), (0, 0)))

    const = lambda shape: pl.BlockSpec(shape, lambda i: (0, 0))   # weights: same block every step
    rel_p, logrel_p = pl.pallas_call(
        _label_classifier_kernel,
        out_shape=(jax.ShapeDtypeStruct((Bp, Kp), jnp.float32),
                   jax.ShapeDtypeStruct((Bp, Kp), jnp.float32)),
        grid=(nb,),
        in_specs=[
            pl.BlockSpec((TB, D), lambda i: (i, 0)),       # input_left tile
            pl.BlockSpec((TB, D), lambda i: (i, 0)),       # input_right tile
            const((D, H)),                                 # wl_t
            const((D, H)),                                 # wr_t
            const((H, Kp + HH)),                           # rhs_l (fused)
            const((H, Kp + HH)),                           # rhs_r (fused)
            const((HH, Kp)),                               # w_bil_mat
            const((1, Kp)),                                # bias (padded = -1e30)
        ],
        out_specs=(pl.BlockSpec((TB, Kp), lambda i: (i, 0)),
                   pl.BlockSpec((TB, Kp), lambda i: (i, 0))),
        compiler_params=pltpu.CompilerParams(
            dimension_semantics=("parallel",)),            # shards batch blocks across v7x's 2 TCs
    )(xl, xr, packed["wl_t"], packed["wr_t"], packed["rhs_l"], packed["rhs_r"],
      packed["w_bil_mat"], packed["bias"])

    return rel_p[:B, :K], logrel_p[:B, :K]


if __name__ == "__main__":
    # Module-consistent small shapes: input_size=32, hidden=16, 41 classes.
    # B=256 demonstrates the batched/gridded path (2 blocks of TB=128).
    B, D, H, K = 256, 32, 16, 41

    key = jax.random.PRNGKey(0)
    ks = jax.random.split(key, 8)
    params = {
        # nn.Linear(input_size, H).weight is [H, D]; stored pre-transposed.
        "wl_t": jax.random.normal(ks[0], (D, H), jnp.float32) * 0.1,
        "wr_t": jax.random.normal(ks[1], (D, H), jnp.float32) * 0.1,
        # nn.Linear(H, K).weight is [K, H]; stored pre-transposed.
        "vl_t": jax.random.normal(ks[2], (H, K), jnp.float32) * 0.1,
        "vr_t": jax.random.normal(ks[3], (H, K), jnp.float32) * 0.1,
        # nn.Bilinear(H, H, K).weight is [K, H, H], bias is [K] (kept 2D here).
        "w_bilinear": jax.random.normal(ks[4], (K, H, H), jnp.float32) * 0.1,
        "b_bilinear": jax.random.normal(ks[5], (1, K), jnp.float32) * 0.1,
    }
    input_left = jax.random.normal(ks[6], (B, D), jnp.float32)
    input_right = jax.random.normal(ks[7], (B, D), jnp.float32)

    # Pure-JAX reference against the original (PyTorch-layout) parameters.
    hl = jax.nn.elu(input_left @ params["wl_t"])
    hr = jax.nn.elu(input_right @ params["wr_t"])
    bil = jnp.einsum("bi,kij,bj->bk", hl, params["w_bilinear"], hr)
    out = bil + params["b_bilinear"] + hl @ params["vl_t"] + hr @ params["vr_t"]
    ref_rel = jax.nn.softmax(out, axis=1)
    ref_log = jax.nn.log_softmax(out + 1e-6, axis=1)

    # f32 packing: tight parity; bf16 packing: deployed path (halved DMA bytes).
    for mm_dtype, tol in ((jnp.float32, 1e-3), (jnp.bfloat16, 2e-2)):
        packed = prepare_label_classifier_params(params, mm_dtype=mm_dtype)
        rel, log_rel = label_classifier(input_left, input_right, packed)
        jax.block_until_ready((rel, log_rel))
        assert rel.shape == (B, K) and log_rel.shape == (B, K)
        assert jnp.allclose(rel, ref_rel, atol=tol, rtol=tol), mm_dtype
        assert jnp.allclose(log_rel, ref_log, atol=tol, rtol=tol), mm_dtype

    print("KERNEL_OK")
</pallas_src>

<mosaic_0001>
module attributes {stable_mosaic.version = 11 : i64} {
  func.func @_label_classifier_kernel(%arg0: i32, %arg1: memref<128x32xf32, #tpu.memory_space<vmem>>, %arg2: memref<128x32xf32, #tpu.memory_space<vmem>>, %arg3: memref<32x16xf32, #tpu.memory_space<vmem>>, %arg4: memref<32x16xf32, #tpu.memory_space<vmem>>, %arg5: memref<16x384xf32, #tpu.memory_space<vmem>>, %arg6: memref<16x384xf32, #tpu.memory_space<vmem>>, %arg7: memref<256x128xf32, #tpu.memory_space<vmem>>, %arg8: memref<1x128xf32, #tpu.memory_space<vmem>>, %arg9: memref<128x128xf32, #tpu.memory_space<vmem>>, %arg10: memref<128x128xf32, #tpu.memory_space<vmem>>) attributes {dimension_semantics = [#tpu.dimension_semantics<parallel>], iteration_bounds = array<i64: 2>, scalar_prefetch = 0 : i64, scratch_operands = 0 : i64, tpu.core_type = #tpu.core_type<tc>, window_params = [{transform_indices = @transform_0, window_bounds = array<i64: 128, 32>}, {transform_indices = @transform_1, window_bounds = array<i64: 128, 32>}, {pipeline_mode = #tpu.pipeline_mode<synchronous>, transform_indices = @transform_2, window_bounds = array<i64: 32, 16>}, {pipeline_mode = #tpu.pipeline_mode<synchronous>, transform_indices = @transform_3, window_bounds = array<i64: 32, 16>}, {pipeline_mode = #tpu.pipeline_mode<synchronous>, transform_indices = @transform_4, window_bounds = array<i64: 16, 384>}, {pipeline_mode = #tpu.pipeline_mode<synchronous>, transform_indices = @transform_5, window_bounds = array<i64: 16, 384>}, {pipeline_mode = #tpu.pipeline_mode<synchronous>, transform_indices = @transform_6, window_bounds = array<i64: 256, 128>}, {pipeline_mode = #tpu.pipeline_mode<synchronous>, transform_indices = @transform_7, window_bounds = array<i64: 1, 128>}, {transform_indices = @transform_8, window_bounds = array<i64: 128, 128>}, {transform_indices = @transform_9, window_bounds = array<i64: 128, 128>}]} {
    %c0 = arith.constant 0 : index
    %c0_0 = arith.constant 0 : index
    %0 = vector.load %arg1[%c0, %c0_0] : memref<128x32xf32, #tpu.memory_space<vmem>>, vector<128x32xf32>
    %c0_1 = arith.constant 0 : index
    %c0_2 = arith.constant 0 : index
    %1 = vector.load %arg3[%c0_1, %c0_2] : memref<32x16xf32, #tpu.memory_space<vmem>>, vector<32x16xf32>
    %cst = arith.constant dense<0.000000e+00> : vector<128x16xf32>
    %2 = tpu.matmul %0, %1, %cst {dimension_numbers = #tpu.dot_dimension_numbers<[1], [0], [0], [1], [0, 0, 1, 1], [], []>} : vector<128x32xf32>, vector<32x16xf32>, vector<128x16xf32> -> vector<128x16xf32>
    %c0_3 = arith.constant 0 : index
    %c0_4 = arith.constant 0 : index
    %3 = vector.load %arg2[%c0_3, %c0_4] : memref<128x32xf32, #tpu.memory_space<vmem>>, vector<128x32xf32>
    %c0_5 = arith.constant 0 : index
    %c0_6 = arith.constant 0 : index
    %4 = vector.load %arg4[%c0_5, %c0_6] : memref<32x16xf32, #tpu.memory_space<vmem>>, vector<32x16xf32>
    %cst_7 = arith.constant dense<0.000000e+00> : vector<128x16xf32>
    %5 = tpu.matmul %3, %4, %cst_7 {dimension_numbers = #tpu.dot_dimension_numbers<[1], [0], [0], [1], [0, 0, 1, 1], [], []>} : vector<128x32xf32>, vector<32x16xf32>, vector<128x16xf32> -> vector<128x16xf32>
    %cst_8 = arith.constant 0.000000e+00 : f32
    %6 = vector.broadcast %cst_8 : f32 to vector<128x16xf32>
    %7 = arith.cmpf ogt, %2, %6 : vector<128x16xf32>
    %8 = math.exp %2 : vector<128x16xf32>
    %cst_9 = arith.constant 1.000000e+00 : f32
    %9 = vector.broadcast %cst_9 : f32 to vector<128x16xf32>
    %10 = arith.subf %8, %9 : vector<128x16xf32>
    %11 = arith.select %7, %2, %10 : vector<128x16xi1>, vector<128x16xf32>
    %cst_10 = arith.constant 0.000000e+00 : f32
    %12 = vector.broadcast %cst_10 : f32 to vector<128x16xf32>
    %13 = arith.cmpf ogt, %5, %12 : vector<128x16xf32>
    %14 = math.exp %5 : vector<128x16xf32>
    %cst_11 = arith.constant 1.000000e+00 : f32
    %15 = vector.broadcast %cst_11 : f32 to vector<128x16xf32>
    %16 = arith.subf %14, %15 : vector<128x16xf32>
    %17 = arith.select %13, %5, %16 : vector<128x16xi1>, vector<128x16xf32>
    %c0_12 = arith.constant 0 : index
    %c0_13 = arith.constant 0 : index
    %18 = vector.load %arg5[%c0_12, %c0_13] : memref<16x384xf32, #tpu.memory_space<vmem>>, vector<16x384xf32>
    %cst_14 = arith.constant dense<0.000000e+00> : vector<128x384xf32>
    %19 = tpu.matmul %11, %18, %cst_14 {dimension_numbers = #tpu.dot_dimension_numbers<[1], [0], [0], [1], [0, 0, 1, 1], [], []>} : vector<128x16xf32>, vector<16x384xf32>, vector<128x384xf32> -> vector<128x384xf32>
    %c0_15 = arith.constant 0 : index
    %c0_16 = arith.constant 0 : index
    %20 = vector.load %arg6[%c0_15, %c0_16] : memref<16x384xf32, #tpu.memory_space<vmem>>, vector<16x384xf32>
    %cst_17 = arith.constant dense<0.000000e+00> : vector<128x384xf32>
    %21 = tpu.matmul %17, %20, %cst_17 {dimension_numbers = #tpu.dot_dimension_numbers<[1], [0], [0], [1], [0, 0, 1, 1], [], []>} : vector<128x16xf32>, vector<16x384xf32>, vector<128x384xf32> -> vector<128x384xf32>
    %22 = vector.extract_strided_slice %19 {offsets = [0, 0], sizes = [128, 128], strides = [1, 1]} : vector<128x384xf32> to vector<128x128xf32>
    %23 = vector.extract_strided_slice %21 {offsets = [0, 0], sizes = [128, 128], strides = [1, 1]} : vector<128x384xf32> to vector<128x128xf32>
    %24 = arith.addf %22, %23 : vector<128x128xf32>
    %25 = vector.extract_strided_slice %19 {offsets = [0, 128], sizes = [128, 256], strides = [1, 1]} : vector<128x384xf32> to vector<128x256xf32>
    %26 = vector.extract_strided_slice %21 {offsets = [0, 128], sizes = [128, 256], strides = [1, 1]} : vector<128x384xf32> to vector<128x256xf32>
    %27 = arith.mulf %25, %26 : vector<128x256xf32>
    %c0_18 = arith.constant 0 : index
    %c0_19 = arith.constant 0 : index
    %28 = vector.load %arg7[%c0_18, %c0_19] : memref<256x128xf32, #tpu.memory_space<vmem>>, vector<256x128xf32>
    %cst_20 = arith.constant dense<0.000000e+00> : vector<128x128xf32>
    %29 = tpu.matmul %27, %28, %cst_20 {dimension_numbers = #tpu.dot_dimension_numbers<[1], [0], [0], [1], [0, 0, 1, 1], [], []>} : vector<128x256xf32>, vector<256x128xf32>, vector<128x128xf32> -> vector<128x128xf32>
    %30 = arith.addf %29, %24 : vector<128x128xf32>
    %c0_21 = arith.constant 0 : index
    %c0_22 = arith.constant 0 : index
    %31 = vector.load %arg8[%c0_21, %c0_22] : memref<1x128xf32, #tpu.memory_space<vmem>>, vector<1x128xf32>
    %32 = vector.broadcast %31 : vector<1x128xf32> to vector<128x128xf32>
    %33 = arith.addf %30, %32 : vector<128x128xf32>
    %cst_23 = arith.constant dense<0xFF800000> : vector<128xf32>
    %34 = vector.multi_reduction <maximumf>, %33, %cst_23 [1] : vector<128x128xf32> to vector<128xf32>
    %35 = vector.shape_cast %34 : vector<128xf32> to vector<128x1xf32>
    %36 = vector.broadcast %35 : vector<128x1xf32> to vector<128x128xf32>
    %37 = arith.subf %33, %36 : vector<128x128xf32>
    %38 = math.exp %37 : vector<128x128xf32>
    %cst_24 = arith.constant dense<0.000000e+00> : vector<128xf32>
    %39 = vector.multi_reduction <add>, %38, %cst_24 [1] : vector<128x128xf32> to vector<128xf32>
    %40 = vector.shape_cast %39 : vector<128xf32> to vector<128x1xf32>
    %41 = tpu.reciprocal %40 {approx = true} : vector<128x1xf32> -> vector<128x1xf32>
    %42 = arith.mulf %40, %41 : vector<128x1xf32>
    %cst_25 = arith.constant 2.000000e+00 : f32
    %43 = vector.broadcast %cst_25 : f32 to vector<128x1xf32>
    %44 = arith.subf %43, %42 : vector<128x1xf32>
    %45 = arith.mulf %41, %44 : vector<128x1xf32>
    %46 = vector.broadcast %45 : vector<128x1xf32> to vector<128x128xf32>
    %47 = arith.mulf %38, %46 : vector<128x128xf32>
    %c0_26 = arith.constant 0 : index
    %c0_27 = arith.constant 0 : index
    %48 = vector.load %arg9[%c0_26, %c0_27] : memref<128x128xf32, #tpu.memory_space<vmem>>, vector<128x128xf32>
    tpu.vector_store %arg9[%c0_26, %c0_27], %47 {strides = array<i32>} : memref<128x128xf32, #tpu.memory_space<vmem>>, vector<128x128xf32>,
    %49 = math.log %40 : vector<128x1xf32>
    %50 = arith.addf %35, %49 : vector<128x1xf32>
    %51 = vector.broadcast %50 : vector<128x1xf32> to vector<128x128xf32>
    %52 = arith.subf %33, %51 : vector<128x128xf32>
    %c0_28 = arith.constant 0 : index
    %c0_29 = arith.constant 0 : index
    %53 = vector.load %arg10[%c0_28, %c0_29] : memref<128x128xf32, #tpu.memory_space<vmem>>, vector<128x128xf32>
    tpu.vector_store %arg10[%c0_28, %c0_29], %52 {strides = array<i32>} : memref<128x128xf32, #tpu.memory_space<vmem>>, vector<128x128xf32>,
    return
  }
  func.func @transform_0(%arg0: i32) -> (i32, i32) {
    %c0_i32 = arith.constant 0 : i32
    %c0_i32_0 = arith.constant 0 : i32
    return %arg0, %c0_i32 : i32, i32
  }
  func.func @transform_1(%arg0: i32) -> (i32, i32) {
    %c0_i32 = arith.constant 0 : i32
    %c0_i32_0 = arith.constant 0 : i32
    return %arg0, %c0_i32 : i32, i32
  }
  func.func @transform_2(%arg0: i32) -> (i32, i32) {
    %c0_i32 = arith.constant 0 : i32
    %c0_i32_0 = arith.constant 0 : i32
    %c0_i32_1 = arith.constant 0 : i32
    return %c0_i32, %c0_i32_0 : i32, i32
  }
  func.func @transform_3(%arg0: i32) -> (i32, i32) {
    %c0_i32 = arith.constant 0 : i32
    %c0_i32_0 = arith.constant 0 : i32
    %c0_i32_1 = arith.constant 0 : i32
    return %c0_i32, %c0_i32_0 : i32, i32
  }
  func.func @transform_4(%arg0: i32) -> (i32, i32) {
    %c0_i32 = arith.constant 0 : i32
    %c0_i32_0 = arith.constant 0 : i32
    %c0_i32_1 = arith.constant 0 : i32
    return %c0_i32, %c0_i32_0 : i32, i32
  }
  func.func @transform_5(%arg0: i32) -> (i32, i32) {
    %c0_i32 = arith.constant 0 : i32
    %c0_i32_0 = arith.constant 0 : i32
    %c0_i32_1 = arith.constant 0 : i32
    return %c0_i32, %c0_i32_0 : i32, i32
  }
  func.func @transform_6(%arg0: i32) -> (i32, i32) {
    %c0_i32 = arith.constant 0 : i32
    %c0_i32_0 = arith.constant 0 : i32
    %c0_i32_1 = arith.constant 0 : i32
    return %c0_i32, %c0_i32_0 : i32, i32
  }
  func.func @transform_7(%arg0: i32) -> (i32, i32) {
    %c0_i32 = arith.constant 0 : i32
    %c0_i32_0 = arith.constant 0 : i32
    %c0_i32_1 = arith.constant 0 : i32
    return %c0_i32, %c0_i32_0 : i32, i32
  }
  func.func @transform_8(%arg0: i32) -> (i32, i32) {
    %c0_i32 = arith.constant 0 : i32
    %c0_i32_0 = arith.constant 0 : i32
    return %arg0, %c0_i32 : i32, i32
  }
  func.func @transform_9(%arg0: i32) -> (i32, i32) {
    %c0_i32 = arith.constant 0 : i32
    %c0_i32_0 = arith.constant 0 : i32
    return %arg0, %c0_i32 : i32, i32
  }
}

</mosaic_0001>

<llo_original>
// kernel: tpu_custom_call.1
$region0: #{tpu_custom_call.1}
  #allocation0 [shape = 'u32[]', space=smem, size = 0x4, offset = 0x4, fixed_abs, tag = 'smem constant byte address 0x4 - core index']
  #allocation1 [shape = 'u32[72,128]{1,0:T(1,128)}', space=vmem, size = 0x9000, scoped, tag = 'internal scratch']
  %s0 = inlined_call_operand.vmem [shape: f32[256,32], index: 0, kind: input, shape index: {}]
  %s1 = inlined_call_operand.vmem [shape: f32[256,32], index: 1, kind: input, shape index: {}]
  %s2 = inlined_call_operand.vmem [shape: f32[32,16], index: 2, kind: input, shape index: {}]
  %s3 = inlined_call_operand.vmem [shape: f32[32,16], index: 3, kind: input, shape index: {}]
  %s4 = inlined_call_operand.vmem [shape: f32[16,384], index: 4, kind: input, shape index: {}]
  %s5 = inlined_call_operand.vmem [shape: f32[16,384], index: 5, kind: input, shape index: {}]
  %s6 = inlined_call_operand.vmem [shape: f32[256,128], index: 6, kind: input, shape index: {}]
  %s7 = inlined_call_operand.vmem [shape: f32[1,128], index: 7, kind: input, shape index: {}]
  %s8 = inlined_call_operand.hbm [shape: f32[256,128], index: 8, kind: output, shape index: {0}]
  %s9 = inlined_call_operand.hbm [shape: f32[256,128], index: 9, kind: output, shape index: {1}]
  %10 = xla_tuple %s8, %s9
  %s11 = sld [smem:[#allocation0]]
  $region73: #{tpu_custom_call.1} parent=0
    _
  %s13 = ssub.s32 1, %s11
  %s14 = scalar_select 0, %s13, %s11
  $region1: #{tpu_custom_call.1} parent=0
    #allocation2 [shape = 'u8[131072]{0}', space=vmem, size = 0x20000, scoped, tag = 'output window, operand 0']
    #allocation3 [shape = 's32[2]{0}', space=sflag, size = 0x8, scoped, tag = 'scoped memory for tpu_custom_call.1']
    #allocation4 [shape = 'u8[131072]{0}', space=vmem, size = 0x20000, scoped, tag = 'output window, operand 1']
    #allocation5 [shape = 's32[2]{0}', space=sflag, size = 0x8, scoped, tag = 'scoped memory for tpu_custom_call.1']
    %15 = vsyncpa [#allocation3], 0
    %s16 = scalar_lea.sflag [#allocation3], 1
    %17 = vsyncpa %s16, 0
    %18 = vsyncpa [#allocation5], 0
    %s19 = scalar_lea.sflag [#allocation5], 1
    %20 = vsyncpa %s19, 0
    loop: start=0, step=1, limit=4
    $region2: #{tpu_custom_call.1} parent=1 // loop_pre_header
      _
    $region3: #{tpu_custom_call.1} parent=1 // loop_header
      %s22 = sphi 0, %s26
      %p23 = scmp.ge.s32.totalorder %s22, 4
      %s32 = sphi 0, %s34
      %s35 = sphi 0, %s32
      %s36 = sphi 0, %s35
      %s52 = sphi 0, %s36
      %s58 = sphi 0, %s60
      %s61 = sphi 0, %s58
      %s62 = sphi 0, %s61
      %s78 = sphi 0, %s62
      %s82 = sphi 0, %s82
      %s84 = sphi 0, %s82
      %s85 = sphi 0, %s84
      %s99 = sphi 0, %s85
      %s103 = sphi 0, %s103
      %s105 = sphi 0, %s103
      %s106 = sphi 0, %s105
      %s120 = sphi 0, %s106
      %s124 = sphi 0, %s124
      %s126 = sphi 0, %s124
      %s127 = sphi 0, %s126
      %s141 = sphi 0, %s127
      %s145 = sphi 0, %s145
      %s147 = sphi 0, %s145
      %s148 = sphi 0, %s147
      %s162 = sphi 0, %s148
      %s166 = sphi 0, %s166
      %s168 = sphi 0, %s166
      %s169 = sphi 0, %s168
      %s183 = sphi 0, %s169
      %s187 = sphi 0, %s187
      %s189 = sphi 0, %s187
      %s190 = sphi 0, %s189
      %s204 = sphi 0, %s190
      %s210 = sphi 0, %s212
      %s213 = sphi 0, %s210
      %s214 = sphi 0, %s213
      %s230 = sphi 0, %s214
      %s236 = sphi 0, %s238
      %s239 = sphi 0, %s236
      %s240 = sphi 0, %s239
      %s256 = sphi 0, %s240
    $region4: #{tpu_custom_call.1} parent=1 // loop_header_branch
      %25 = sbr.rel (%p23) target = $region8
    $region5: #{tpu_custom_call.1} parent=1 // loop_body
      %s27 = ssub.s32 %s22, 1
      %s28 = ssub.s32 %s22, 2
      %s29 = sadd.s32 %s22, 1
      %s30 = ssub.s32 %s22, %s29
      %p31 = scmp.eq.s32.totalorder %s30, 0
      %s33 = sadd.s32 %s32, 1
      %s34 = scalar_select %p31, %s32, %s33
      %p37 = pneg %p31
      %p38 = scmp.eq.s32.totalorder %s22, 1
      %p39 = por %p37, %p38
      %p40 = scmp.ne.s32.totalorder %s32, %s35
      %p41 = scmp.eq.s32.totalorder %s22, 0
      %p42 = por %p40, %p41
      %p43 = scmp.ne.s32.totalorder %s32, %s35
      %p44 = scmp.eq.s32.totalorder %s27, 1
      %p45 = por %p43, %p44
      %p46 = scmp.ne.s32.totalorder %s35, %s36
      %p47 = scmp.eq.s32.totalorder %s27, 0
      %p48 = por %p46, %p47
      %p49 = scmp.ne.s32.totalorder %s35, %s36
      %p50 = scmp.eq.s32.totalorder %s28, 1
      %p51 = por %p49, %p50
      %p53 = scmp.ne.s32.totalorder %s36, %s52
      %p54 = scmp.eq.s32.totalorder %s28, 0
      %p55 = por %p53, %p54
      %s56 = ssub.s32 %s22, %s29
      %p57 = scmp.eq.s32.totalorder %s56, 0
      %s59 = sadd.s32 %s58, 1
      %s60 = scalar_select %p57, %s58, %s59
      %p63 = pneg %p57
      %p64 = scmp.eq.s32.totalorder %s22, 1
      %p65 = por %p63, %p64
      %p66 = scmp.ne.s32.totalorder %s58, %s61
      %p67 = scmp.eq.s32.totalorder %s22, 0
      %p68 = por %p66, %p67
      %p69 = scmp.ne.s32.totalorder %s58, %s61
      %p70 = scmp.eq.s32.totalorder %s27, 1
      %p71 = por %p69, %p70
      %p72 = scmp.ne.s32.totalorder %s61, %s62
      %p73 = scmp.eq.s32.totalorder %s27, 0
      %p74 = por %p72, %p73
      %p75 = scmp.ne.s32.totalorder %s61, %s62
      %p76 = scmp.eq.s32.totalorder %s28, 1
      %p77 = por %p75, %p76
      %p79 = scmp.ne.s32.totalorder %s62, %s78
      %p80 = scmp.eq.s32.totalorder %s28, 0
      %p81 = por %p79, %p80
      %s83 = sadd.s32 %s82, 1
      %p86 = scmp.eq.s32.totalorder %s22, 1
      %p87 = scmp.ne.s32.totalorder %s82, %s84
      %p88 = scmp.eq.s32.totalorder %s22, 0
      %p89 = por %p87, %p88
      %p90 = scmp.ne.s32.totalorder %s82, %s84
      %p91 = scmp.eq.s32.totalorder %s27, 1
      %p92 = por %p90, %p91
      %p93 = scmp.ne.s32.totalorder %s84, %s85
      %p94 = scmp.eq.s32.totalorder %s27, 0
      %p95 = por %p93, %p94
      %p96 = scmp.ne.s32.totalorder %s84, %s85
      %p97 = scmp.eq.s32.totalorder %s28, 1
      %p98 = por %p96, %p97
      %p100 = scmp.ne.s32.totalorder %s85, %s99
      %p101 = scmp.eq.s32.totalorder %s28, 0
      %p102 = por %p100, %p101
      %s104 = sadd.s32 %s103, 1
      %p107 = scmp.eq.s32.totalorder %s22, 1
      %p108 = scmp.ne.s32.totalorder %s103, %s105
      %p109 = scmp.eq.s32.totalorder %s22, 0
      %p110 = por %p108, %p109
      %p111 = scmp.ne.s32.totalorder %s103, %s105
      %p112 = scmp.eq.s32.totalorder %s27, 1
      %p113 = por %p111, %p112
      %p114 = scmp.ne.s32.totalorder %s105, %s106
      %p115 = scmp.eq.s32.totalorder %s27, 0
      %p116 = por %p114, %p115
      %p117 = scmp.ne.s32.totalorder %s105, %s106
      %p118 = scmp.eq.s32.totalorder %s28, 1
      %p119 = por %p117, %p118
      %p121 = scmp.ne.s32.totalorder %s106, %s120
      %p122 = scmp.eq.s32.totalorder %s28, 0
      %p123 = por %p121, %p122
      %s125 = sadd.s32 %s124, 1
      %p128 = scmp.eq.s32.totalorder %s22, 1
      %p129 = scmp.ne.s32.totalorder %s124, %s126
      %p130 = scmp.eq.s32.totalorder %s22, 0
      %p131 = por %p129, %p130
      %p132 = scmp.ne.s32.totalorder %s124, %s126
      %p133 = scmp.eq.s32.totalorder %s27, 1
      %p134 = por %p132, %p133
      %p135 = scmp.ne.s32.totalorder %s126, %s127
      %p136 = scmp.eq.s32.totalorder %s27, 0
      %p137 = por %p135, %p136
      %p138 = scmp.ne.s32.totalorder %s126, %s127
      %p139 = scmp.eq.s32.totalorder %s28, 1
      %p140 = por %p138, %p139
      %p142 = scmp.ne.s32.totalorder %s127, %s141
      %p143 = scmp.eq.s32.totalorder %s28, 0
      %p144 = por %p142, %p143
      %s146 = sadd.s32 %s145, 1
      %p149 = scmp.eq.s32.totalorder %s22, 1
      %p150 = scmp.ne.s32.totalorder %s145, %s147
      %p151 = scmp.eq.s32.totalorder %s22, 0
      %p152 = por %p150, %p151
      %p153 = scmp.ne.s32.totalorder %s145, %s147
      %p154 = scmp.eq.s32.totalorder %s27, 1
      %p155 = por %p153, %p154
      %p156 = scmp.ne.s32.totalorder %s147, %s148
      %p157 = scmp.eq.s32.totalorder %s27, 0
      %p158 = por %p156, %p157
      %p159 = scmp.ne.s32.totalorder %s147, %s148
      %p160 = scmp.eq.s32.totalorder %s28, 1
      %p161 = por %p159, %p160
      %p163 = scmp.ne.s32.totalorder %s148, %s162
      %p164 = scmp.eq.s32.totalorder %s28, 0
      %p165 = por %p163, %p164
      %s167 = sadd.s32 %s166, 1
      %p170 = scmp.eq.s32.totalorder %s22, 1
      %p171 = scmp.ne.s32.totalorder %s166, %s168
      %p172 = scmp.eq.s32.totalorder %s22, 0
      %p173 = por %p171, %p172
      %p174 = scmp.ne.s32.totalorder %s166, %s168
      %p175 = scmp.eq.s32.totalorder %s27, 1
      %p176 = por %p174, %p175
      %p177 = scmp.ne.s32.totalorder %s168, %s169
      %p178 = scmp.eq.s32.totalorder %s27, 0
      %p179 = por %p177, %p178
      %p180 = scmp.ne.s32.totalorder %s168, %s169
      %p181 = scmp.eq.s32.totalorder %s28, 1
      %p182 = por %p180, %p181
      %p184 = scmp.ne.s32.totalorder %s169, %s183
      %p185 = scmp.eq.s32.totalorder %s28, 0
      %p186 = por %p184, %p185
      %s188 = sadd.s32 %s187, 1
      %p191 = scmp.eq.s32.totalorder %s22, 1
      %p192 = scmp.ne.s32.totalorder %s187, %s189
      %p193 = scmp.eq.s32.totalorder %s22, 0
      %p194 = por %p192, %p193
      %p195 = scmp.ne.s32.totalorder %s187, %s189
      %p196 = scmp.eq.s32.totalorder %s27, 1
      %p197 = por %p195, %p196
      %p198 = scmp.ne.s32.totalorder %s189, %s190
      %p199 = scmp.eq.s32.totalorder %s27, 0
      %p200 = por %p198, %p199
      %p201 = scmp.ne.s32.totalorder %s189, %s190
      %p202 = scmp.eq.s32.totalorder %s28, 1
      %p203 = por %p201, %p202
      %p205 = scmp.ne.s32.totalorder %s190, %s204
      %p206 = scmp.eq.s32.totalorder %s28, 0
      %p207 = por %p205, %p206
      %s208 = ssub.s32 %s22, %s29
      %p209 = scmp.eq.s32.totalorder %s208, 0
      %s211 = sadd.s32 %s210, 1
      %s212 = scalar_select %p209, %s210, %s211
      %p215 = pneg %p209
      %p216 = scmp.eq.s32.totalorder %s22, 1
      %p217 = por %p215, %p216
      %p218 = scmp.ne.s32.totalorder %s210, %s213
      %p219 = scmp.eq.s32.totalorder %s22, 0
      %p220 = por %p218, %p219
      %p221 = scmp.ne.s32.totalorder %s210, %s213
      %p222 = scmp.eq.s32.totalorder %s27, 1
      %p223 = por %p221, %p222
      %p224 = scmp.ne.s32.totalorder %s213, %s214
      %p225 = scmp.eq.s32.totalorder %s27, 0
      %p226 = por %p224, %p225
      %p227 = scmp.ne.s32.totalorder %s213, %s214
      %p228 = scmp.eq.s32.totalorder %s28, 1
      %p229 = por %p227, %p228
      %p231 = scmp.ne.s32.totalorder %s214, %s230
      %p232 = scmp.eq.s32.totalorder %s28, 0
      %p233 = por %p231, %p232
      %s234 = ssub.s32 %s22, %s29
      %p235 = scmp.eq.s32.totalorder %s234, 0
      %s237 = sadd.s32 %s236, 1
      %s238 = scalar_select %p235, %s236, %s237
      %p241 = pneg %p235
      %p242 = scmp.eq.s32.totalorder %s22, 1
      %p243 = por %p241, %p242
      %p244 = scmp.ne.s32.totalorder %s236, %s239
      %p245 = scmp.eq.s32.totalorder %s22, 0
      %p246 = por %p244, %p245
      %p247 = scmp.ne.s32.totalorder %s236, %s239
      %p248 = scmp.eq.s32.totalorder %s27, 1
      %p249 = por %p247, %p248
      %p250 = scmp.ne.s32.totalorder %s239, %s240
      %p251 = scmp.eq.s32.totalorder %s27, 0
      %p252 = por %p250, %p251
      %p253 = scmp.ne.s32.totalorder %s239, %s240
      %p254 = scmp.eq.s32.totalorder %s28, 1
      %p255 = por %p253, %p254
      %p257 = scmp.ne.s32.totalorder %s240, %s256
      %p258 = scmp.eq.s32.totalorder %s28, 0
      %p259 = por %p257, %p258
      %p260 = scmp.le.s32.totalorder 1, %s22
      %p261 = scmp.lt.s32.totalorder %s22, 3
      %p262 = pnand %p260, %p261
      %p263 = pneg %p262
      // Predicated region
      $region9: #{tpu_custom_call.1} parent=5 // pred_check
        _
      $region10: #{tpu_custom_call.1} parent=5 // pred_check_branch
        %265 = sbr.rel (%p262) target = $region12
      $region11: #{tpu_custom_call.1} parent=5 // pred_region
        %s266 = ssub.s32 %s22, 1
        // Predicated region
        $region13: #{tpu_custom_call.1} parent=11 // pred_check
          %p267 = pneg %p95
        $region14: #{tpu_custom_call.1} parent=11 // pred_check_branch
          %269 = sbr.rel (%p267) target = $region16
        $region15: #{tpu_custom_call.1} parent=11 // pred_region
          _
        $region16: #{tpu_custom_call.1} parent=11 // pred_fallthru
          _
        // Predicated region
        $region17: #{tpu_custom_call.1} parent=11 // pred_check
          %p270 = pneg %p116
        $region18: #{tpu_custom_call.1} parent=11 // pred_check_branch
          %272 = sbr.rel (%p270) target = $region20
        $region19: #{tpu_custom_call.1} parent=11 // pred_region
          _
        $region20: #{tpu_custom_call.1} parent=11 // pred_fallthru
          _
        // Predicated region
        $region21: #{tpu_custom_call.1} parent=11 // pred_check
          %p273 = pneg %p137
        $region22: #{tpu_custom_call.1} parent=11 // pred_check_branch
          %275 = sbr.rel (%p273) target = $region24
        $region23: #{tpu_custom_call.1} parent=11 // pred_region
          _
        $region24: #{tpu_custom_call.1} parent=11 // pred_fallthru
          _
        // Predicated region
        $region25: #{tpu_custom_call.1} parent=11 // pred_check
          %p276 = pneg %p158
        $region26: #{tpu_custom_call.1} parent=11 // pred_check_branch
          %278 = sbr.rel (%p276) target = $region28
        $region27: #{tpu_custom_call.1} parent=11 // pred_region
          _
        $region28: #{tpu_custom_call.1} parent=11 // pred_fallthru
          _
        // Predicated region
        $region29: #{tpu_custom_call.1} parent=11 // pred_check
          %p279 = pneg %p179
        $region30: #{tpu_custom_call.1} parent=11 // pred_check_branch
          %281 = sbr.rel (%p279) target = $region32
        $region31: #{tpu_custom_call.1} parent=11 // pred_region
          _
        $region32: #{tpu_custom_call.1} parent=11 // pred_fallthru
          _
        // Predicated region
        $region33: #{tpu_custom_call.1} parent=11 // pred_check
          %p282 = pneg %p200
        $region34: #{tpu_custom_call.1} parent=11 // pred_check_branch
          %284 = sbr.rel (%p282) target = $region36
        $region35: #{tpu_custom_call.1} parent=11 // pred_region
          _
        $region36: #{tpu_custom_call.1} parent=11 // pred_fallthru
          _
      $region12: #{tpu_custom_call.1} parent=5 // pred_fallthru
        _
      %p285 = scmp.lt.s32.totalorder %s22, 2
      // Predicated region
      $region37: #{tpu_custom_call.1} parent=5 // pred_check
        %p286 = pneg %p285
      $region38: #{tpu_custom_call.1} parent=5 // pred_check_branch
        %288 = sbr.rel (%p286) target = $region40
      $region39: #{tpu_custom_call.1} parent=5 // pred_region
        // Predicated region
        $region41: #{tpu_custom_call.1} parent=39 // pred_check
          %p289 = pneg %p42
        $region42: #{tpu_custom_call.1} parent=39 // pred_check_branch
          %291 = sbr.rel (%p289) target = $region44
        $region43: #{tpu_custom_call.1} parent=39 // pred_region
          %s292 = smul.u32 16, %s22
          %p293 = scmp.lt.s32.totalorder %s292, 31
          %s294 = scalar_select %p293, %s292, 31
          %s295 = smul.addr %s294, 8
          %s296 = scalar_lea.vmem %s0, %s295
          %s297 = smul.u32 16, %s22
        $region44: #{tpu_custom_call.1} parent=39 // pred_fallthru
          _
        // Predicated region
        $region45: #{tpu_custom_call.1} parent=39 // pred_check
          %p298 = pneg %p68
        $region46: #{tpu_custom_call.1} parent=39 // pred_check_branch
          %300 = sbr.rel (%p298) target = $region48
        $region47: #{tpu_custom_call.1} parent=39 // pred_region
          %s301 = smul.u32 16, %s22
          %p302 = scmp.lt.s32.totalorder %s301, 31
          %s303 = scalar_select %p302, %s301, 31
          %s304 = smul.addr %s303, 8
          %s305 = scalar_lea.vmem %s1, %s304
          %s306 = smul.u32 16, %s22
        $region48: #{tpu_custom_call.1} parent=39 // pred_fallthru
          _
      $region40: #{tpu_custom_call.1} parent=5 // pred_fallthru
        _
      %p307 = scmp.le.s32.totalorder 1, %s22
      %p308 = scmp.lt.s32.totalorder %s22, 3
      %p309 = pnand %p307, %p308
      %p310 = pneg %p309
      // Predicated region
      $region49: #{tpu_custom_call.1} parent=5 // pred_check
        _
      $region50: #{tpu_custom_call.1} parent=5 // pred_check_branch
        %312 = sbr.rel (%p309) target = $region52
      $region51: #{tpu_custom_call.1} parent=5 // pred_region
        %s313 = ssub.s32 %s22, 1
        %s314 = smul.u32 16, %s27
        %p315 = scmp.lt.s32.totalorder %s314, 31
        %s316 = scalar_select %p315, %s314, 31
        %s317 = smul.addr %s316, 8
        %s318 = scalar_lea.vmem %s0, %s317
        %p319 = pneg %p48
        %p320 = pneg %p45
        %s321 = smul.u32 16, %s27
        %p322 = scmp.lt.s32.totalorder %s321, 31
        %s323 = scalar_select %p322, %s321, 31
        %s324 = smul.addr %s323, 8
        %s325 = scalar_lea.vmem %s1, %s324
        %p326 = pneg %p74
        %p327 = pneg %p71
        %p328 = pneg %p95
        %p329 = pneg %p92
        %p330 = pneg %p116
        %p331 = pneg %p113
        %p332 = pneg %p137
        %p333 = pneg %p134
        %p334 = pneg %p158
        %p335 = pneg %p155
        %p336 = pneg %p179
        %p337 = pneg %p176
        %p338 = pneg %p200
        %p339 = pneg %p197
        %p340 = pneg %p226
        %p341 = pneg %p223
        %s342 = sand.u32 %s213, 1
        %s343 = scalar_lea.sflag [#allocation3], %s342
        %s344 = sand.u32 %s213, 1
        %s345 = smul.addr %s344, 128
        %s346 = scalar_lea.vmem [#allocation2], %s345
        %p347 = pneg %p252
        %p348 = pneg %p249
        %s349 = sand.u32 %s239, 1
        %s350 = scalar_lea.sflag [#allocation5], %s349
        %s351 = sand.u32 %s239, 1
        %s352 = smul.addr %s351, 128
        %s353 = scalar_lea.vmem [#allocation4], %s352
        %s354 = smul.u32 16, %s27
        %p355 = scmp.lt.s32.totalorder %s354, 31
        %s356 = scalar_select %p355, %s354, 31
        %s357 = smul.addr %s356, 8
        %s358 = scalar_lea.vmem %s0, %s357
        %s359 = smul.u32 16, %s27
        %s360 = smul.u32 16, %s27
        %p361 = scmp.lt.s32.totalorder %s360, 31
        %s362 = scalar_select %p361, %s360, 31
        %s363 = smul.addr %s362, 8
        %s364 = scalar_lea.vmem %s1, %s363
        %s365 = smul.u32 16, %s27
        %s366 = smul.u32 16, %s27
        %s367 = smul.u32 16, %s27
        %v368 = vld [vmem:[%s358] sm:$0xff]
        %v369 = vld [vmem:[%s358 + $0x8] sm:$0xff]
        %v370 = vld [vmem:[%s358 + $0x10] sm:$0xff]
        %v371 = vld [vmem:[%s358 + $0x18] sm:$0xff]
        %v372 = vld [vmem:[%s358 + $0x20] sm:$0xff]
        %v373 = vld [vmem:[%s358 + $0x28] sm:$0xff]
        %v374 = vld [vmem:[%s358 + $0x30] sm:$0xff]
        %v375 = vld [vmem:[%s358 + $0x38] sm:$0xff]
        %v376 = vld [vmem:[%s358 + $0x40] sm:$0xff]
        %v377 = vld [vmem:[%s358 + $0x48] sm:$0xff]
        %v378 = vld [vmem:[%s358 + $0x50] sm:$0xff]
        %v379 = vld [vmem:[%s358 + $0x58] sm:$0xff]
        %v380 = vld [vmem:[%s358 + $0x60] sm:$0xff]
        %v381 = vld [vmem:[%s358 + $0x68] sm:$0xff]
        %v382 = vld [vmem:[%s358 + $0x70] sm:$0xff]
        %v383 = vld [vmem:[%s358 + $0x78] sm:$0xff]
        %v384 = vld [vmem:[%s2] sm:$0xff]
        %v385 = vld [vmem:[%s2 + $0x8] sm:$0xff]
        %v386 = vld [vmem:[%s2 + $0x10] sm:$0xff]
        %v387 = vld [vmem:[%s2 + $0x18] sm:$0xff]
        %vm388 = vcmask 261120
        %v390 = vsel %vm388, %v368, 0
        %v393 = vsel %vm388, %v369, 0
        %v396 = vsel %vm388, %v370, 0
        %v399 = vsel %vm388, %v371, 0
        %v402 = vsel %vm388, %v372, 0
        %v405 = vsel %vm388, %v373, 0
        %v408 = vsel %vm388, %v374, 0
        %v411 = vsel %vm388, %v375, 0
        %v414 = vsel %vm388, %v376, 0
        %v417 = vsel %vm388, %v377, 0
        %v420 = vsel %vm388, %v378, 0
        %v423 = vsel %vm388, %v379, 0
        %v426 = vsel %vm388, %v380, 0
        %v429 = vsel %vm388, %v381, 0
        %v432 = vsel %vm388, %v382, 0
        %v435 = vsel %vm388, %v383, 0
        %437 = vmatpush.msra.mxu0 0.0
        %438 = vmatpush.msra.mxu0 0.0
        %439 = vmatpush.msra.mxu0 0.0
        %440 = vmatpush.msra.mxu0 0.0
        %441 = vmatpush.msra.mxu0 0.0
        %442 = vmatpush.msra.mxu0 0.0
        %443 = vmatpush.msra.mxu0 0.0
        %444 = vmatpush.msra.mxu0 0.0
        %445 = vmatpush.msra.mxu0 0.0
        %446 = vmatpush.msra.mxu0 0.0
        %447 = vmatpush.msra.mxu0 0.0
        %448 = vmatpush.msra.mxu0 0.0
        %449 = vmatpush.msra.mxu0 %v387
        %450 = vmatpush.msra.mxu0 %v386
        %451 = vmatpush.msra.mxu0 %v385
        %452 = vmatpush.msra.mxu0 %v384
        %453 = vmatmul.f32.gmra.mxu0 %v390
        %v454 = vpop.f32.mrf.mxu0
        %v455 = vadd.f32 0.0, %v454
        %456 = vmatmul.f32.gmra.mxu0 %v393
        %v457 = vpop.f32.mrf.mxu0
        %v458 = vadd.f32 0.0, %v457
        %459 = vmatmul.f32.gmra.mxu0 %v396
        %v460 = vpop.f32.mrf.mxu0
        %v461 = vadd.f32 0.0, %v460
        %462 = vmatmul.f32.gmra.mxu0 %v399
        %v463 = vpop.f32.mrf.mxu0
        %v464 = vadd.f32 0.0, %v463
        %465 = vmatmul.f32.gmra.mxu0 %v402
        %v466 = vpop.f32.mrf.mxu0
        %v467 = vadd.f32 0.0, %v466
        %468 = vmatmul.f32.gmra.mxu0 %v405
        %v469 = vpop.f32.mrf.mxu0
        %v470 = vadd.f32 0.0, %v469
        %471 = vmatmul.f32.gmra.mxu0 %v408
        %v472 = vpop.f32.mrf.mxu0
        %v473 = vadd.f32 0.0, %v472
        %474 = vmatmul.f32.gmra.mxu0 %v411
        %v475 = vpop.f32.mrf.mxu0
        %v476 = vadd.f32 0.0, %v475
        %477 = vmatmul.f32.gmra.mxu0 %v414
        %v478 = vpop.f32.mrf.mxu0
        %v479 = vadd.f32 0.0, %v478
        %480 = vmatmul.f32.gmra.mxu0 %v417
        %v481 = vpop.f32.mrf.mxu0
        %v482 = vadd.f32 0.0, %v481
        %483 = vmatmul.f32.gmra.mxu0 %v420
        %v484 = vpop.f32.mrf.mxu0
        %v485 = vadd.f32 0.0, %v484
        %486 = vmatmul.f32.gmra.mxu0 %v423
        %v487 = vpop.f32.mrf.mxu0
        %v488 = vadd.f32 0.0, %v487
        %489 = vmatmul.f32.gmra.mxu0 %v426
        %v490 = vpop.f32.mrf.mxu0
        %v491 = vadd.f32 0.0, %v490
        %492 = vmatmul.f32.gmra.mxu0 %v429
        %v493 = vpop.f32.mrf.mxu0
        %v494 = vadd.f32 0.0, %v493
        %495 = vmatmul.f32.gmra.mxu0 %v432
        %v496 = vpop.f32.mrf.mxu0
        %v497 = vadd.f32 0.0, %v496
        %498 = vmatmul.f32.gmra.mxu0 %v435
        %v499 = vpop.f32.mrf.mxu0
        %v500 = vadd.f32 0.0, %v499
        %501 = vdwg.mxu0
        %v502 = vld [vmem:[%s364] sm:$0xff]
        %v503 = vld [vmem:[%s364 + $0x8] sm:$0xff]
        %v504 = vld [vmem:[%s364 + $0x10] sm:$0xff]
        %v505 = vld [vmem:[%s364 + $0x18] sm:$0xff]
        %v506 = vld [vmem:[%s364 + $0x20] sm:$0xff]
        %v507 = vld [vmem:[%s364 + $0x28] sm:$0xff]
        %v508 = vld [vmem:[%s364 + $0x30] sm:$0xff]
        %v509 = vld [vmem:[%s364 + $0x38] sm:$0xff]
        %v510 = vld [vmem:[%s364 + $0x40] sm:$0xff]
        %v511 = vld [vmem:[%s364 + $0x48] sm:$0xff]
        %v512 = vld [vmem:[%s364 + $0x50] sm:$0xff]
        %v513 = vld [vmem:[%s364 + $0x58] sm:$0xff]
        %v514 = vld [vmem:[%s364 + $0x60] sm:$0xff]
        %v515 = vld [vmem:[%s364 + $0x68] sm:$0xff]
        %v516 = vld [vmem:[%s364 + $0x70] sm:$0xff]
        %v517 = vld [vmem:[%s364 + $0x78] sm:$0xff]
        %v518 = vld [vmem:[%s3] sm:$0xff]
        %v519 = vld [vmem:[%s3 + $0x8] sm:$0xff]
        %v520 = vld [vmem:[%s3 + $0x10] sm:$0xff]
        %v521 = vld [vmem:[%s3 + $0x18] sm:$0xff]
        %v523 = vsel %vm388, %v502, 0
        %v526 = vsel %vm388, %v503, 0
        %v529 = vsel %vm388, %v504, 0
        %v532 = vsel %vm388, %v505, 0
        %v535 = vsel %vm388, %v506, 0
        %v538 = vsel %vm388, %v507, 0
        %v541 = vsel %vm388, %v508, 0
        %v544 = vsel %vm388, %v509, 0
        %v547 = vsel %vm388, %v510, 0
        %v550 = vsel %vm388, %v511, 0
        %v553 = vsel %vm388, %v512, 0
        %v556 = vsel %vm388, %v513, 0
        %v559 = vsel %vm388, %v514, 0
        %v562 = vsel %vm388, %v515, 0
        %v565 = vsel %vm388, %v516, 0
        %v568 = vsel %vm388, %v517, 0
        %570 = vmatpush.msra.mxu0 0.0
        %571 = vmatpush.msra.mxu0 0.0
        %572 = vmatpush.msra.mxu0 0.0
        %573 = vmatpush.msra.mxu0 0.0
        %574 = vmatpush.msra.mxu0 0.0
        %575 = vmatpush.msra.mxu0 0.0
        %576 = vmatpush.msra.mxu0 0.0
        %577 = vmatpush.msra.mxu0 0.0
        %578 = vmatpush.msra.mxu0 0.0
        %579 = vmatpush.msra.mxu0 0.0
        %580 = vmatpush.msra.mxu0 0.0
        %581 = vmatpush.msra.mxu0 0.0
        %582 = vmatpush.msra.mxu0 %v521
        %583 = vmatpush.msra.mxu0 %v520
        %584 = vmatpush.msra.mxu0 %v519
        %585 = vmatpush.msra.mxu0 %v518
        %586 = vmatmul.f32.gmra.mxu0 %v523
        %v587 = vpop.f32.mrf.mxu0
        %v588 = vadd.f32 0.0, %v587
        %589 = vmatmul.f32.gmra.mxu0 %v526
        %v590 = vpop.f32.mrf.mxu0
        %v591 = vadd.f32 0.0, %v590
        %592 = vmatmul.f32.gmra.mxu0 %v529
        %v593 = vpop.f32.mrf.mxu0
        %v594 = vadd.f32 0.0, %v593
        %595 = vmatmul.f32.gmra.mxu0 %v532
        %v596 = vpop.f32.mrf.mxu0
        %v597 = vadd.f32 0.0, %v596
        %598 = vmatmul.f32.gmra.mxu0 %v535
        %v599 = vpop.f32.mrf.mxu0
        %v600 = vadd.f32 0.0, %v599
        %601 = vmatmul.f32.gmra.mxu0 %v538
        %v602 = vpop.f32.mrf.mxu0
        %v603 = vadd.f32 0.0, %v602
        %604 = vmatmul.f32.gmra.mxu0 %v541
        %v605 = vpop.f32.mrf.mxu0
        %v606 = vadd.f32 0.0, %v605
        %607 = vmatmul.f32.gmra.mxu0 %v544
        %v608 = vpop.f32.mrf.mxu0
        %v609 = vadd.f32 0.0, %v608
        %610 = vmatmul.f32.gmra.mxu0 %v547
        %v611 = vpop.f32.mrf.mxu0
        %v612 = vadd.f32 0.0, %v611
        %613 = vmatmul.f32.gmra.mxu0 %v550
        %v614 = vpop.f32.mrf.mxu0
        %v615 = vadd.f32 0.0, %v614
        %616 = vmatmul.f32.gmra.mxu0 %v553
        %v617 = vpop.f32.mrf.mxu0
        %v618 = vadd.f32 0.0, %v617
        %619 = vmatmul.f32.gmra.mxu0 %v556
        %v620 = vpop.f32.mrf.mxu0
        %v621 = vadd.f32 0.0, %v620
        %622 = vmatmul.f32.gmra.mxu0 %v559
        %v623 = vpop.f32.mrf.mxu0
        %v624 = vadd.f32 0.0, %v623
        %625 = vmatmul.f32.gmra.mxu0 %v562
        %v626 = vpop.f32.mrf.mxu0
        %v627 = vadd.f32 0.0, %v626
        %628 = vmatmul.f32.gmra.mxu0 %v565
        %v629 = vpop.f32.mrf.mxu0
        %v630 = vadd.f32 0.0, %v629
        %631 = vmatmul.f32.gmra.mxu0 %v568
        %v632 = vpop.f32.mrf.mxu0
        %v633 = vadd.f32 0.0, %v632
        %634 = vdwg.mxu0
        %vm635 = vcmp.gt.f32.partialorder %v455, 0.0
        %vm636 = vcmp.gt.f32.partialorder %v458, 0.0
        %vm637 = vcmp.gt.f32.partialorder %v461, 0.0
        %vm638 = vcmp.gt.f32.partialorder %v464, 0.0
        %vm639 = vcmp.gt.f32.partialorder %v467, 0.0
        %vm640 = vcmp.gt.f32.partialorder %v470, 0.0
        %vm641 = vcmp.gt.f32.partialorder %v473, 0.0
        %vm642 = vcmp.gt.f32.partialorder %v476, 0.0
        %vm643 = vcmp.gt.f32.partialorder %v479, 0.0
        %vm644 = vcmp.gt.f32.partialorder %v482, 0.0
        %vm645 = vcmp.gt.f32.partialorder %v485, 0.0
        %vm646 = vcmp.gt.f32.partialorder %v488, 0.0
        %vm647 = vcmp.gt.f32.partialorder %v491, 0.0
        %vm648 = vcmp.gt.f32.partialorder %v494, 0.0
        %vm649 = vcmp.gt.f32.partialorder %v497, 0.0
        %vm650 = vcmp.gt.f32.partialorder %v500, 0.0
        %v651 = vmul.f32 %v455, 1.442695
        %v652 = vpow.pop %v651
        %v653 = vmul.f32 %v458, 1.442695
        %v654 = vpow.pop %v653
        %v655 = vmul.f32 %v461, 1.442695
        %v656 = vpow.pop %v655
        %v657 = vmul.f32 %v464, 1.442695
        %v658 = vpow.pop %v657
        %v659 = vmul.f32 %v467, 1.442695
        %v660 = vpow.pop %v659
        %v661 = vmul.f32 %v470, 1.442695
        %v662 = vpow.pop %v661
        %v663 = vmul.f32 %v473, 1.442695
        %v664 = vpow.pop %v663
        %v665 = vmul.f32 %v476, 1.442695
        %v666 = vpow.pop %v665
        %v667 = vmul.f32 %v479, 1.442695
        %v668 = vpow.pop %v667
        %v669 = vmul.f32 %v482, 1.442695
        %v670 = vpow.pop %v669
        %v671 = vmul.f32 %v485, 1.442695
        %v672 = vpow.pop %v671
        %v673 = vmul.f32 %v488, 1.442695
        %v674 = vpow.pop %v673
        %v675 = vmul.f32 %v491, 1.442695
        %v676 = vpow.pop %v675
        %v677 = vmul.f32 %v494, 1.442695
        %v678 = vpow.pop %v677
        %v679 = vmul.f32 %v497, 1.442695
        %v680 = vpow.pop %v679
        %v681 = vmul.f32 %v500, 1.442695
        %v682 = vpow.pop %v681
        %v683 = vsub.f32 %v652, 1.0
        %v684 = vsub.f32 %v654, 1.0
        %v685 = vsub.f32 %v656, 1.0
        %v686 = vsub.f32 %v658, 1.0
        %v687 = vsub.f32 %v660, 1.0
        %v688 = vsub.f32 %v662, 1.0
        %v689 = vsub.f32 %v664, 1.0
        %v690 = vsub.f32 %v666, 1.0
        %v691 = vsub.f32 %v668, 1.0
        %v692 = vsub.f32 %v670, 1.0
        %v693 = vsub.f32 %v672, 1.0
        %v694 = vsub.f32 %v674, 1.0
        %v695 = vsub.f32 %v676, 1.0
        %v696 = vsub.f32 %v678, 1.0
        %v697 = vsub.f32 %v680, 1.0
        %v698 = vsub.f32 %v682, 1.0
        %v699 = vsel %vm635, %v455, %v683
        %v700 = vsel %vm636, %v458, %v684
        %v701 = vsel %vm637, %v461, %v685
        %v702 = vsel %vm638, %v464, %v686
        %v703 = vsel %vm639, %v467, %v687
        %v704 = vsel %vm640, %v470, %v688
        %v705 = vsel %vm641, %v473, %v689
        %v706 = vsel %vm642, %v476, %v690
        %v707 = vsel %vm643, %v479, %v691
        %v708 = vsel %vm644, %v482, %v692
        %v709 = vsel %vm645, %v485, %v693
        %v710 = vsel %vm646, %v488, %v694
        %v711 = vsel %vm647, %v491, %v695
        %v712 = vsel %vm648, %v494, %v696
        %v713 = vsel %vm649, %v497, %v697
        %v714 = vsel %vm650, %v500, %v698
        %vm715 = vcmp.gt.f32.partialorder %v588, 0.0
        %vm716 = vcmp.gt.f32.partialorder %v591, 0.0
        %vm717 = vcmp.gt.f32.partialorder %v594, 0.0
        %vm718 = vcmp.gt.f32.partialorder %v597, 0.0
        %vm719 = vcmp.gt.f32.partialorder %v600, 0.0
        %vm720 = vcmp.gt.f32.partialorder %v603, 0.0
        %vm721 = vcmp.gt.f32.partialorder %v606, 0.0
        %vm722 = vcmp.gt.f32.partialorder %v609, 0.0
        %vm723 = vcmp.gt.f32.partialorder %v612, 0.0
        %vm724 = vcmp.gt.f32.partialorder %v615, 0.0
        %vm725 = vcmp.gt.f32.partialorder %v618, 0.0
        %vm726 = vcmp.gt.f32.partialorder %v621, 0.0
        %vm727 = vcmp.gt.f32.partialorder %v624, 0.0
        %vm728 = vcmp.gt.f32.partialorder %v627, 0.0
        %vm729 = vcmp.gt.f32.partialorder %v630, 0.0
        %vm730 = vcmp.gt.f32.partialorder %v633, 0.0
        %v731 = vmul.f32 %v588, 1.442695
        %v732 = vpow.pop %v731
        %v733 = vmul.f32 %v591, 1.442695
        %v734 = vpow.pop %v733
        %v735 = vmul.f32 %v594, 1.442695
        %v736 = vpow.pop %v735
        %v737 = vmul.f32 %v597, 1.442695
        %v738 = vpow.pop %v737
        %v739 = vmul.f32 %v600, 1.442695
        %v740 = vpow.pop %v739
        %v741 = vmul.f32 %v603, 1.442695
        %v742 = vpow.pop %v741
        %v743 = vmul.f32 %v606, 1.442695
        %v744 = vpow.pop %v743
        %v745 = vmul.f32 %v609, 1.442695
        %v746 = vpow.pop %v745
        %v747 = vmul.f32 %v612, 1.442695
        %v748 = vpow.pop %v747
        %v749 = vmul.f32 %v615, 1.442695
        %v750 = vpow.pop %v749
        %v751 = vmul.f32 %v618, 1.442695
        %v752 = vpow.pop %v751
        %v753 = vmul.f32 %v621, 1.442695
        %v754 = vpow.pop %v753
        %v755 = vmul.f32 %v624, 1.442695
        %v756 = vpow.pop %v755
        %v757 = vmul.f32 %v627, 1.442695
        %v758 = vpow.pop %v757
        %v759 = vmul.f32 %v630, 1.442695
        %v760 = vpow.pop %v759
        %v761 = vmul.f32 %v633, 1.442695
        %v762 = vpow.pop %v761
        %v763 = vsub.f32 %v732, 1.0
        %v764 = vsub.f32 %v734, 1.0
        %v765 = vsub.f32 %v736, 1.0
        %v766 = vsub.f32 %v738, 1.0
        %v767 = vsub.f32 %v740, 1.0
        %v768 = vsub.f32 %v742, 1.0
        %v769 = vsub.f32 %v744, 1.0
        %v770 = vsub.f32 %v746, 1.0
        %v771 = vsub.f32 %v748, 1.0
        %v772 = vsub.f32 %v750, 1.0
        %v773 = vsub.f32 %v752, 1.0
        %v774 = vsub.f32 %v754, 1.0
        %v775 = vsub.f32 %v756, 1.0
        %v776 = vsub.f32 %v758, 1.0
        %v777 = vsub.f32 %v760, 1.0
        %v778 = vsub.f32 %v762, 1.0
        %v779 = vsel %vm715, %v588, %v763
        %v780 = vsel %vm716, %v591, %v764
        %v781 = vsel %vm717, %v594, %v765
        %v782 = vsel %vm718, %v597, %v766
        %v783 = vsel %vm719, %v600, %v767
        %v784 = vsel %vm720, %v603, %v768
        %v785 = vsel %vm721, %v606, %v769
        %v786 = vsel %vm722, %v609, %v770
        %v787 = vsel %vm723, %v612, %v771
        %v788 = vsel %vm724, %v615, %v772
        %v789 = vsel %vm725, %v618, %v773
        %v790 = vsel %vm726, %v621, %v774
        %v791 = vsel %vm727, %v624, %v775
        %v792 = vsel %vm728, %v627, %v776
        %v793 = vsel %vm729, %v630, %v777
        %v794 = vsel %vm730, %v633, %v778
        %v795 = vld [vmem:[%s4] sm:$0xff]
        %v796 = vld [vmem:[%s4 + $0x8] sm:$0xff]
        %v797 = vld [vmem:[%s4 + $0x10] sm:$0xff]
        %v798 = vld [vmem:[%s4 + $0x18] sm:$0xff]
        %v799 = vld [vmem:[%s4 + $0x20] sm:$0xff]
        %v800 = vld [vmem:[%s4 + $0x28] sm:$0xff]
        %vm801 = vcmask 130048
        %v803 = vsel %vm801, %v699, 0
        %v806 = vsel %vm801, %v700, 0
        %v809 = vsel %vm801, %v701, 0
        %v812 = vsel %vm801, %v702, 0
        %v815 = vsel %vm801, %v703, 0
        %v818 = vsel %vm801, %v704, 0
        %v821 = vsel %vm801, %v705, 0
        %v824 = vsel %vm801, %v706, 0
        %v827 = vsel %vm801, %v707, 0
        %v830 = vsel %vm801, %v708, 0
        %v833 = vsel %vm801, %v709, 0
        %v836 = vsel %vm801, %v710, 0
        %v839 = vsel %vm801, %v711, 0
        %v842 = vsel %vm801, %v712, 0
        %v845 = vsel %vm801, %v713, 0
        %v848 = vsel %vm801, %v714, 0
        %850 = vmatpush.msra.mxu0 0.0
        %851 = vmatpush.msra.mxu0 0.0
        %852 = vmatpush.msra.mxu0 0.0
        %853 = vmatpush.msra.mxu0 0.0
        %854 = vmatpush.msra.mxu0 0.0
        %855 = vmatpush.msra.mxu0 0.0
        %856 = vmatpush.msra.mxu0 0.0
        %857 = vmatpush.msra.mxu0 0.0
        %858 = vmatpush.msra.mxu0 0.0
        %859 = vmatpush.msra.mxu0 0.0
        %860 = vmatpush.msra.mxu0 0.0
        %861 = vmatpush.msra.mxu0 0.0
        %862 = vmatpush.msra.mxu0 0.0
        %863 = vmatpush.msra.mxu0 0.0
        %864 = vmatpush.msra.mxu0 %v798
        %865 = vmatpush.msra.mxu0 %v795
        %866 = vmatmul.f32.gmra.mxu0 %v803
        %v867 = vpop.f32.mrf.mxu0
        %v868 = vadd.f32 0.0, %v867
        %869 = vmatmul.f32.gmra.mxu0 %v806
        %v870 = vpop.f32.mrf.mxu0
        %v871 = vadd.f32 0.0, %v870
        %872 = vmatmul.f32.gmra.mxu0 %v809
        %v873 = vpop.f32.mrf.mxu0
        %v874 = vadd.f32 0.0, %v873
        %875 = vmatmul.f32.gmra.mxu0 %v812
        %v876 = vpop.f32.mrf.mxu0
        %v877 = vadd.f32 0.0, %v876
        %878 = vmatmul.f32.gmra.mxu0 %v815
        %v879 = vpop.f32.mrf.mxu0
        %v880 = vadd.f32 0.0, %v879
        %881 = vmatmul.f32.gmra.mxu0 %v818
        %v882 = vpop.f32.mrf.mxu0
        %v883 = vadd.f32 0.0, %v882
        %884 = vmatmul.f32.gmra.mxu0 %v821
        %v885 = vpop.f32.mrf.mxu0
        %v886 = vadd.f32 0.0, %v885
        %887 = vmatmul.f32.gmra.mxu0 %v824
        %v888 = vpop.f32.mrf.mxu0
        %v889 = vadd.f32 0.0, %v888
        %890 = vmatmul.f32.gmra.mxu0 %v827
        %v891 = vpop.f32.mrf.mxu0
        %v892 = vadd.f32 0.0, %v891
        %893 = vmatmul.f32.gmra.mxu0 %v830
        %v894 = vpop.f32.mrf.mxu0
        %v895 = vadd.f32 0.0, %v894
        %896 = vmatmul.f32.gmra.mxu0 %v833
        %v897 = vpop.f32.mrf.mxu0
        %v898 = vadd.f32 0.0, %v897
        %899 = vmatmul.f32.gmra.mxu0 %v836
        %v900 = vpop.f32.mrf.mxu0
        %v901 = vadd.f32 0.0, %v900
        %902 = vmatmul.f32.gmra.mxu0 %v839
        %v903 = vpop.f32.mrf.mxu0
        %v904 = vadd.f32 0.0, %v903
        %905 = vmatmul.f32.gmra.mxu0 %v842
        %v906 = vpop.f32.mrf.mxu0
        %v907 = vadd.f32 0.0, %v906
        %908 = vmatmul.f32.gmra.mxu0 %v845
        %v909 = vpop.f32.mrf.mxu0
        %v910 = vadd.f32 0.0, %v909
        %911 = vmatmul.f32.gmra.mxu0 %v848
        %v912 = vpop.f32.mrf.mxu0
        %v913 = vadd.f32 0.0, %v912
        %914 = vdwg.mxu0
        %915 = vmatpush.msra.mxu0 0.0
        %916 = vmatpush.msra.mxu0 0.0
        %917 = vmatpush.msra.mxu0 0.0
        %918 = vmatpush.msra.mxu0 0.0
        %919 = vmatpush.msra.mxu0 0.0
        %920 = vmatpush.msra.mxu0 0.0
        %921 = vmatpush.msra.mxu0 0.0
        %922 = vmatpush.msra.mxu0 0.0
        %923 = vmatpush.msra.mxu0 0.0
        %924 = vmatpush.msra.mxu0 0.0
        %925 = vmatpush.msra.mxu0 0.0
        %926 = vmatpush.msra.mxu0 0.0
        %927 = vmatpush.msra.mxu0 0.0
        %928 = vmatpush.msra.mxu0 0.0
        %929 = vmatpush.msra.mxu0 %v799
        %930 = vmatpush.msra.mxu0 %v796
        %931 = vmatmul.f32.gmra.mxu0 %v803
        %v932 = vpop.f32.mrf.mxu0
        %v933 = vadd.f32 0.0, %v932
        %934 = vmatmul.f32.gmra.mxu0 %v806
        %v935 = vpop.f32.mrf.mxu0
        %v936 = vadd.f32 0.0, %v935
        %937 = vmatmul.f32.gmra.mxu0 %v809
        %v938 = vpop.f32.mrf.mxu0
        %v939 = vadd.f32 0.0, %v938
        %940 = vmatmul.f32.gmra.mxu0 %v812
        %v941 = vpop.f32.mrf.mxu0
        %v942 = vadd.f32 0.0, %v941
        %943 = vmatmul.f32.gmra.mxu0 %v815
        %v944 = vpop.f32.mrf.mxu0
        %v945 = vadd.f32 0.0, %v944
        %946 = vmatmul.f32.gmra.mxu0 %v818
        %v947 = vpop.f32.mrf.mxu0
        %v948 = vadd.f32 0.0, %v947
        %949 = vmatmul.f32.gmra.mxu0 %v821
        %v950 = vpop.f32.mrf.mxu0
        %v951 = vadd.f32 0.0, %v950
        %952 = vmatmul.f32.gmra.mxu0 %v824
        %v953 = vpop.f32.mrf.mxu0
        %v954 = vadd.f32 0.0, %v953
        %955 = vmatmul.f32.gmra.mxu0 %v827
        %v956 = vpop.f32.mrf.mxu0
        %v957 = vadd.f32 0.0, %v956
        %958 = vmatmul.f32.gmra.mxu0 %v830
        %v959 = vpop.f32.mrf.mxu0
        %v960 = vadd.f32 0.0, %v959
        %961 = vmatmul.f32.gmra.mxu0 %v833
        %v962 = vpop.f32.mrf.mxu0
        %v963 = vadd.f32 0.0, %v962
        %964 = vmatmul.f32.gmra.mxu0 %v836
        %v965 = vpop.f32.mrf.mxu0
        %v966 = vadd.f32 0.0, %v965
        %967 = vmatmul.f32.gmra.mxu0 %v839
        %v968 = vpop.f32.mrf.mxu0
        %v969 = vadd.f32 0.0, %v968
        %970 = vmatmul.f32.gmra.mxu0 %v842
        %v971 = vpop.f32.mrf.mxu0
        %v972 = vadd.f32 0.0, %v971
        %973 = vmatmul.f32.gmra.mxu0 %v845
        %v974 = vpop.f32.mrf.mxu0
        %v975 = vadd.f32 0.0, %v974
        %976 = vmatmul.f32.gmra.mxu0 %v848
        %v977 = vpop.f32.mrf.mxu0
        %v978 = vadd.f32 0.0, %v977
        %979 = vdwg.mxu0
        %980 = vmatpush.msra.mxu0 0.0
        %981 = vmatpush.msra.mxu0 0.0
        %982 = vmatpush.msra.mxu0 0.0
        %983 = vmatpush.msra.mxu0 0.0
        %984 = vmatpush.msra.mxu0 0.0
        %985 = vmatpush.msra.mxu0 0.0
        %986 = vmatpush.msra.mxu0 0.0
        %987 = vmatpush.msra.mxu0 0.0
        %988 = vmatpush.msra.mxu0 0.0
        %989 = vmatpush.msra.mxu0 0.0
        %990 = vmatpush.msra.mxu0 0.0
        %991 = vmatpush.msra.mxu0 0.0
        %992 = vmatpush.msra.mxu0 0.0
        %993 = vmatpush.msra.mxu0 0.0
        %994 = vmatpush.msra.mxu0 %v800
        %995 = vmatpush.msra.mxu0 %v797
        %996 = vmatmul.f32.gmra.mxu0 %v803
        %v997 = vpop.f32.mrf.mxu0
        %v998 = vadd.f32 0.0, %v997
        %999 = vmatmul.f32.gmra.mxu0 %v806
        %v1000 = vpop.f32.mrf.mxu0
        %v1001 = vadd.f32 0.0, %v1000
        %1002 = vmatmul.f32.gmra.mxu0 %v809
        %v1003 = vpop.f32.mrf.mxu0
        %v1004 = vadd.f32 0.0, %v1003
        %1005 = vmatmul.f32.gmra.mxu0 %v812
        %v1006 = vpop.f32.mrf.mxu0
        %v1007 = vadd.f32 0.0, %v1006
        %1008 = vmatmul.f32.gmra.mxu0 %v815
        %v1009 = vpop.f32.mrf.mxu0
        %v1010 = vadd.f32 0.0, %v1009
        %1011 = vmatmul.f32.gmra.mxu0 %v818
        %v1012 = vpop.f32.mrf.mxu0
        %v1013 = vadd.f32 0.0, %v1012
        %1014 = vmatmul.f32.gmra.mxu0 %v821
        %v1015 = vpop.f32.mrf.mxu0
        %v1016 = vadd.f32 0.0, %v1015
        %1017 = vmatmul.f32.gmra.mxu0 %v824
        %v1018 = vpop.f32.mrf.mxu0
        %v1019 = vadd.f32 0.0, %v1018
        %1020 = vmatmul.f32.gmra.mxu0 %v827
        %v1021 = vpop.f32.mrf.mxu0
        %v1022 = vadd.f32 0.0, %v1021
        %1023 = vmatmul.f32.gmra.mxu0 %v830
        %v1024 = vpop.f32.mrf.mxu0
        %v1025 = vadd.f32 0.0, %v1024
        %1026 = vmatmul.f32.gmra.mxu0 %v833
        %v1027 = vpop.f32.mrf.mxu0
        %v1028 = vadd.f32 0.0, %v1027
        %1029 = vmatmul.f32.gmra.mxu0 %v836
        %v1030 = vpop.f32.mrf.mxu0
        %v1031 = vadd.f32 0.0, %v1030
        %1032 = vmatmul.f32.gmra.mxu0 %v839
        %v1033 = vpop.f32.mrf.mxu0
        %v1034 = vadd.f32 0.0, %v1033
        %1035 = vmatmul.f32.gmra.mxu0 %v842
        %v1036 = vpop.f32.mrf.mxu0
        %v1037 = vadd.f32 0.0, %v1036
        %1038 = vmatmul.f32.gmra.mxu0 %v845
        %v1039 = vpop.f32.mrf.mxu0
        %v1040 = vadd.f32 0.0, %v1039
        %1041 = vmatmul.f32.gmra.mxu0 %v848
        %v1042 = vpop.f32.mrf.mxu0
        %v1043 = vadd.f32 0.0, %v1042
        %1044 = vdwg.mxu0
        %v1045 = vld [vmem:[%s5] sm:$0xff]
        %v1046 = vld [vmem:[%s5 + $0x8] sm:$0xff]
        %v1047 = vld [vmem:[%s5 + $0x10] sm:$0xff]
        %v1048 = vld [vmem:[%s5 + $0x18] sm:$0xff]
        %v1049 = vld [vmem:[%s5 + $0x20] sm:$0xff]
        %v1050 = vld [vmem:[%s5 + $0x28] sm:$0xff]
        %v1052 = vsel %vm801, %v779, 0
        %v1055 = vsel %vm801, %v780, 0
        %v1058 = vsel %vm801, %v781, 0
        %v1061 = vsel %vm801, %v782, 0
        %v1064 = vsel %vm801, %v783, 0
        %v1067 = vsel %vm801, %v784, 0
        %v1070 = vsel %vm801, %v785, 0
        %v1073 = vsel %vm801, %v786, 0
        %v1076 = vsel %vm801, %v787, 0
        %v1079 = vsel %vm801, %v788, 0
        %v1082 = vsel %vm801, %v789, 0
        %v1085 = vsel %vm801, %v790, 0
        %v1088 = vsel %vm801, %v791, 0
        %v1091 = vsel %vm801, %v792, 0
        %v1094 = vsel %vm801, %v793, 0
        %v1097 = vsel %vm801, %v794, 0
        %1099 = vmatpush.msra.mxu0 0.0
        %1100 = vmatpush.msra.mxu0 0.0
        %1101 = vmatpush.msra.mxu0 0.0
        %1102 = vmatpush.msra.mxu0 0.0
        %1103 = vmatpush.msra.mxu0 0.0
        %1104 = vmatpush.msra.mxu0 0.0
        %1105 = vmatpush.msra.mxu0 0.0
        %1106 = vmatpush.msra.mxu0 0.0
        %1107 = vmatpush.msra.mxu0 0.0
        %1108 = vmatpush.msra.mxu0 0.0
        %1109 = vmatpush.msra.mxu0 0.0
        %1110 = vmatpush.msra.mxu0 0.0
        %1111 = vmatpush.msra.mxu0 0.0
        %1112 = vmatpush.msra.mxu0 0.0
        %1113 = vmatpush.msra.mxu0 %v1048
        %1114 = vmatpush.msra.mxu0 %v1045
        %1115 = vmatmul.f32.gmra.mxu0 %v1052
        %v1116 = vpop.f32.mrf.mxu0
        %v1117 = vadd.f32 0.0, %v1116
        %1118 = vmatmul.f32.gmra.mxu0 %v1055
        %v1119 = vpop.f32.mrf.mxu0
        %v1120 = vadd.f32 0.0, %v1119
        %1121 = vmatmul.f32.gmra.mxu0 %v1058
        %v1122 = vpop.f32.mrf.mxu0
        %v1123 = vadd.f32 0.0, %v1122
        %1124 = vmatmul.f32.gmra.mxu0 %v1061
        %v1125 = vpop.f32.mrf.mxu0
        %v1126 = vadd.f32 0.0, %v1125
        %1127 = vmatmul.f32.gmra.mxu0 %v1064
        %v1128 = vpop.f32.mrf.mxu0
        %v1129 = vadd.f32 0.0, %v1128
        %1130 = vmatmul.f32.gmra.mxu0 %v1067
        %v1131 = vpop.f32.mrf.mxu0
        %v1132 = vadd.f32 0.0, %v1131
        %1133 = vmatmul.f32.gmra.mxu0 %v1070
        %v1134 = vpop.f32.mrf.mxu0
        %v1135 = vadd.f32 0.0, %v1134
        %1136 = vmatmul.f32.gmra.mxu0 %v1073
        %v1137 = vpop.f32.mrf.mxu0
        %v1138 = vadd.f32 0.0, %v1137
        %1139 = vmatmul.f32.gmra.mxu0 %v1076
        %v1140 = vpop.f32.mrf.mxu0
        %v1141 = vadd.f32 0.0, %v1140
        %1142 = vmatmul.f32.gmra.mxu0 %v1079
        %v1143 = vpop.f32.mrf.mxu0
        %v1144 = vadd.f32 0.0, %v1143
        %1145 = vmatmul.f32.gmra.mxu0 %v1082
        %v1146 = vpop.f32.mrf.mxu0
        %v1147 = vadd.f32 0.0, %v1146
        %1148 = vmatmul.f32.gmra.mxu0 %v1085
        %v1149 = vpop.f32.mrf.mxu0
        %v1150 = vadd.f32 0.0, %v1149
        %1151 = vmatmul.f32.gmra.mxu0 %v1088
        %v1152 = vpop.f32.mrf.mxu0
        %v1153 = vadd.f32 0.0, %v1152
        %1154 = vmatmul.f32.gmra.mxu0 %v1091
        %v1155 = vpop.f32.mrf.mxu0
        %v1156 = vadd.f32 0.0, %v1155
        %1157 = vmatmul.f32.gmra.mxu0 %v1094
        %v1158 = vpop.f32.mrf.mxu0
        %v1159 = vadd.f32 0.0, %v1158
        %1160 = vmatmul.f32.gmra.mxu0 %v1097
        %v1161 = vpop.f32.mrf.mxu0
        %v1162 = vadd.f32 0.0, %v1161
        %1163 = vdwg.mxu0
        %1164 = vmatpush.msra.mxu0 0.0
        %1165 = vmatpush.msra.mxu0 0.0
        %1166 = vmatpush.msra.mxu0 0.0
        %1167 = vmatpush.msra.mxu0 0.0
        %1168 = vmatpush.msra.mxu0 0.0
        %1169 = vmatpush.msra.mxu0 0.0
        %1170 = vmatpush.msra.mxu0 0.0
        %1171 = vmatpush.msra.mxu0 0.0
        %1172 = vmatpush.msra.mxu0 0.0
        %1173 = vmatpush.msra.mxu0 0.0
        %1174 = vmatpush.msra.mxu0 0.0
        %1175 = vmatpush.msra.mxu0 0.0
        %1176 = vmatpush.msra.mxu0 0.0
        %1177 = vmatpush.msra.mxu0 0.0
        %1178 = vmatpush.msra.mxu0 %v1049
        %1179 = vmatpush.msra.mxu0 %v1046
        %1180 = vmatmul.f32.gmra.mxu0 %v1052
        %v1181 = vpop.f32.mrf.mxu0
        %v1182 = vadd.f32 0.0, %v1181
        %1183 = vmatmul.f32.gmra.mxu0 %v1055
        %v1184 = vpop.f32.mrf.mxu0
        %v1185 = vadd.f32 0.0, %v1184
        %1186 = vmatmul.f32.gmra.mxu0 %v1058
        %v1187 = vpop.f32.mrf.mxu0
        %v1188 = vadd.f32 0.0, %v1187
        %1189 = vmatmul.f32.gmra.mxu0 %v1061
        %v1190 = vpop.f32.mrf.mxu0
        %v1191 = vadd.f32 0.0, %v1190
        %1192 = vmatmul.f32.gmra.mxu0 %v1064
        %v1193 = vpop.f32.mrf.mxu0
        %v1194 = vadd.f32 0.0, %v1193
        %1195 = vmatmul.f32.gmra.mxu0 %v1067
        %v1196 = vpop.f32.mrf.mxu0
        %v1197 = vadd.f32 0.0, %v1196
        %1198 = vmatmul.f32.gmra.mxu0 %v1070
        %v1199 = vpop.f32.mrf.mxu0
        %v1200 = vadd.f32 0.0, %v1199
        %1201 = vmatmul.f32.gmra.mxu0 %v1073
        %v1202 = vpop.f32.mrf.mxu0
        %v1203 = vadd.f32 0.0, %v1202
        %1204 = vmatmul.f32.gmra.mxu0 %v1076
        %v1205 = vpop.f32.mrf.mxu0
        %v1206 = vadd.f32 0.0, %v1205
        %1207 = vmatmul.f32.gmra.mxu0 %v1079
        %v1208 = vpop.f32.mrf.mxu0
        %v1209 = vadd.f32 0.0, %v1208
        %1210 = vmatmul.f32.gmra.mxu0 %v1082
        %v1211 = vpop.f32.mrf.mxu0
        %v1212 = vadd.f32 0.0, %v1211
        %1213 = vmatmul.f32.gmra.mxu0 %v1085
        %v1214 = vpop.f32.mrf.mxu0
        %v1215 = vadd.f32 0.0, %v1214
        %1216 = vmatmul.f32.gmra.mxu0 %v1088
        %v1217 = vpop.f32.mrf.mxu0
        %v1218 = vadd.f32 0.0, %v1217
        %1219 = vmatmul.f32.gmra.mxu0 %v1091
        %v1220 = vpop.f32.mrf.mxu0
        %v1221 = vadd.f32 0.0, %v1220
        %1222 = vmatmul.f32.gmra.mxu0 %v1094
        %v1223 = vpop.f32.mrf.mxu0
        %v1224 = vadd.f32 0.0, %v1223
        %1225 = vmatmul.f32.gmra.mxu0 %v1097
        %v1226 = vpop.f32.mrf.mxu0
        %v1227 = vadd.f32 0.0, %v1226
        %1228 = vdwg.mxu0
        %1229 = vmatpush.msra.mxu0 0.0
        %1230 = vmatpush.msra.mxu0 0.0
        %1231 = vmatpush.msra.mxu0 0.0
        %1232 = vmatpush.msra.mxu0 0.0
        %1233 = vmatpush.msra.mxu0 0.0
        %1234 = vmatpush.msra.mxu0 0.0
        %1235 = vmatpush.msra.mxu0 0.0
        %1236 = vmatpush.msra.mxu0 0.0
        %1237 = vmatpush.msra.mxu0 0.0
        %1238 = vmatpush.msra.mxu0 0.0
        %1239 = vmatpush.msra.mxu0 0.0
        %1240 = vmatpush.msra.mxu0 0.0
        %1241 = vmatpush.msra.mxu0 0.0
        %1242 = vmatpush.msra.mxu0 0.0
        %1243 = vmatpush.msra.mxu0 %v1050
        %1244 = vmatpush.msra.mxu0 %v1047
        %1245 = vmatmul.f32.gmra.mxu0 %v1052
        %v1246 = vpop.f32.mrf.mxu0
        %v1247 = vadd.f32 0.0, %v1246
        %1248 = vmatmul.f32.gmra.mxu0 %v1055
        %v1249 = vpop.f32.mrf.mxu0
        %v1250 = vadd.f32 0.0, %v1249
        %1251 = vmatmul.f32.gmra.mxu0 %v1058
        %v1252 = vpop.f32.mrf.mxu0
        %v1253 = vadd.f32 0.0, %v1252
        %1254 = vmatmul.f32.gmra.mxu0 %v1061
        %v1255 = vpop.f32.mrf.mxu0
        %v1256 = vadd.f32 0.0, %v1255
        %1257 = vmatmul.f32.gmra.mxu0 %v1064
        %v1258 = vpop.f32.mrf.mxu0
        %v1259 = vadd.f32 0.0, %v1258
        %1260 = vmatmul.f32.gmra.mxu0 %v1067
        %v1261 = vpop.f32.mrf.mxu0
        %v1262 = vadd.f32 0.0, %v1261
        %1263 = vmatmul.f32.gmra.mxu0 %v1070
        %v1264 = vpop.f32.mrf.mxu0
        %v1265 = vadd.f32 0.0, %v1264
        %1266 = vmatmul.f32.gmra.mxu0 %v1073
        %v1267 = vpop.f32.mrf.mxu0
        %v1268 = vadd.f32 0.0, %v1267
        %1269 = vmatmul.f32.gmra.mxu0 %v1076
        %v1270 = vpop.f32.mrf.mxu0
        %v1271 = vadd.f32 0.0, %v1270
        %1272 = vmatmul.f32.gmra.mxu0 %v1079
        %v1273 = vpop.f32.mrf.mxu0
        %v1274 = vadd.f32 0.0, %v1273
        %1275 = vmatmul.f32.gmra.mxu0 %v1082
        %v1276 = vpop.f32.mrf.mxu0
        %v1277 = vadd.f32 0.0, %v1276
        %1278 = vmatmul.f32.gmra.mxu0 %v1085
        %v1279 = vpop.f32.mrf.mxu0
        %v1280 = vadd.f32 0.0, %v1279
        %1281 = vmatmul.f32.gmra.mxu0 %v1088
        %v1282 = vpop.f32.mrf.mxu0
        %v1283 = vadd.f32 0.0, %v1282
        %1284 = vmatmul.f32.gmra.mxu0 %v1091
        %v1285 = vpop.f32.mrf.mxu0
        %v1286 = vadd.f32 0.0, %v1285
        %1287 = vmatmul.f32.gmra.mxu0 %v1094
        %v1288 = vpop.f32.mrf.mxu0
        %v1289 = vadd.f32 0.0, %v1288
        %1290 = vmatmul.f32.gmra.mxu0 %v1097
        %v1291 = vpop.f32.mrf.mxu0
        %v1292 = vadd.f32 0.0, %v1291
        %1293 = vdwg.mxu0
        %v1294 = vadd.f32 %v868, %v1117
        %v1295 = vadd.f32 %v871, %v1120
        %v1296 = vadd.f32 %v874, %v1123
        %v1297 = vadd.f32 %v877, %v1126
        %v1298 = vadd.f32 %v880, %v1129
        %v1299 = vadd.f32 %v883, %v1132
        %v1300 = vadd.f32 %v886, %v1135
        %v1301 = vadd.f32 %v889, %v1138
        %v1302 = vadd.f32 %v892, %v1141
        %v1303 = vadd.f32 %v895, %v1144
        %v1304 = vadd.f32 %v898, %v1147
        %v1305 = vadd.f32 %v901, %v1150
        %v1306 = vadd.f32 %v904, %v1153
        %v1307 = vadd.f32 %v907, %v1156
        %v1308 = vadd.f32 %v910, %v1159
        %v1309 = vadd.f32 %v913, %v1162
        %v1310 = vmul.f32 %v933, %v1182
        %v1311 = vmul.f32 %v998, %v1247
        %v1312 = vmul.f32 %v936, %v1185
        %v1313 = vmul.f32 %v1001, %v1250
        %v1314 = vmul.f32 %v939, %v1188
        %v1315 = vmul.f32 %v1004, %v1253
        %v1316 = vmul.f32 %v942, %v1191
        %v1317 = vmul.f32 %v1007, %v1256
        %v1318 = vmul.f32 %v945, %v1194
        %v1319 = vmul.f32 %v1010, %v1259
        %v1320 = vmul.f32 %v948, %v1197
        %v1321 = vmul.f32 %v1013, %v1262
        %v1322 = vmul.f32 %v951, %v1200
        %v1323 = vmul.f32 %v1016, %v1265
        %v1324 = vmul.f32 %v954, %v1203
        %v1325 = vmul.f32 %v1019, %v1268
        %v1326 = vmul.f32 %v957, %v1206
        %v1327 = vmul.f32 %v1022, %v1271
        %v1328 = vmul.f32 %v960, %v1209
        %v1329 = vmul.f32 %v1025, %v1274
        %v1330 = vmul.f32 %v963, %v1212
        %v1331 = vmul.f32 %v1028, %v1277
        %v1332 = vmul.f32 %v966, %v1215
        %v1333 = vmul.f32 %v1031, %v1280
        %v1334 = vmul.f32 %v969, %v1218
        %v1335 = vmul.f32 %v1034, %v1283
        %v1336 = vmul.f32 %v972, %v1221
        %v1337 = vmul.f32 %v1037, %v1286
        %v1338 = vmul.f32 %v975, %v1224
        %v1339 = vmul.f32 %v1040, %v1289
        %v1340 = vmul.f32 %v978, %v1227
        %v1341 = vmul.f32 %v1043, %v1292
        %v1342 = vld [vmem:[%s6] sm:$0xff]
        %v1343 = vld [vmem:[%s6 + $0x8] sm:$0xff]
        %v1344 = vld [vmem:[%s6 + $0x10] sm:$0xff]
        %v1345 = vld [vmem:[%s6 + $0x18] sm:$0xff]
        %v1346 = vld [vmem:[%s6 + $0x20] sm:$0xff]
        %v1347 = vld [vmem:[%s6 + $0x28] sm:$0xff]
        %v1348 = vld [vmem:[%s6 + $0x30] sm:$0xff]
        %v1349 = vld [vmem:[%s6 + $0x38] sm:$0xff]
        %v1350 = vld [vmem:[%s6 + $0x40] sm:$0xff]
        %v1351 = vld [vmem:[%s6 + $0x48] sm:$0xff]
        %v1352 = vld [vmem:[%s6 + $0x50] sm:$0xff]
        %v1353 = vld [vmem:[%s6 + $0x58] sm:$0xff]
        %v1354 = vld [vmem:[%s6 + $0x60] sm:$0xff]
        %v1355 = vld [vmem:[%s6 + $0x68] sm:$0xff]
        %v1356 = vld [vmem:[%s6 + $0x70] sm:$0xff]
        %v1357 = vld [vmem:[%s6 + $0x78] sm:$0xff]
        %v1358 = vld [vmem:[%s6 + $0x80] sm:$0xff]
        %v1359 = vld [vmem:[%s6 + $0x88] sm:$0xff]
        %v1360 = vld [vmem:[%s6 + $0x90] sm:$0xff]
        %v1361 = vld [vmem:[%s6 + $0x98] sm:$0xff]
        %v1362 = vld [vmem:[%s6 + $0xa0] sm:$0xff]
        %v1363 = vld [vmem:[%s6 + $0xa8] sm:$0xff]
        %v1364 = vld [vmem:[%s6 + $0xb0] sm:$0xff]
        %v1365 = vld [vmem:[%s6 + $0xb8] sm:$0xff]
        %v1366 = vld [vmem:[%s6 + $0xc0] sm:$0xff]
        %v1367 = vld [vmem:[%s6 + $0xc8] sm:$0xff]
        %v1368 = vld [vmem:[%s6 + $0xd0] sm:$0xff]
        %v1369 = vld [vmem:[%s6 + $0xd8] sm:$0xff]
        %v1370 = vld [vmem:[%s6 + $0xe0] sm:$0xff]
        %v1371 = vld [vmem:[%s6 + $0xe8] sm:$0xff]
        %v1372 = vld [vmem:[%s6 + $0xf0] sm:$0xff]
        %v1373 = vld [vmem:[%s6 + $0xf8] sm:$0xff]
        %1374 = vmatpush.msra.mxu0 %v1357
        %1375 = vmatpush.msra.mxu0 %v1356
        %1376 = vmatpush.msra.mxu0 %v1355
        %1377 = vmatpush.msra.mxu0 %v1354
        %1378 = vmatpush.msra.mxu0 %v1353
        %1379 = vmatpush.msra.mxu0 %v1352
        %1380 = vmatpush.msra.mxu0 %v1351
        %1381 = vmatpush.msra.mxu0 %v1350
        %1382 = vmatpush.msra.mxu0 %v1349
        %1383 = vmatpush.msra.mxu0 %v1348
        %1384 = vmatpush.msra.mxu0 %v1347
        %1385 = vmatpush.msra.mxu0 %v1346
        %1386 = vmatpush.msra.mxu0 %v1345
        %1387 = vmatpush.msra.mxu0 %v1344
        %1388 = vmatpush.msra.mxu0 %v1343
        %1389 = vmatpush.msra.mxu0 %v1342
        %1390 = vmatmul.f32.gmra.mxu0 %v1310
        %v1391 = vpop.f32.mrf.mxu0
        %v1392 = vadd.f32 %v1294, %v1391
        %1393 = vmatmul.f32.gmra.mxu0 %v1312
        %v1394 = vpop.f32.mrf.mxu0
        %v1395 = vadd.f32 %v1295, %v1394
        %1396 = vmatmul.f32.gmra.mxu0 %v1314
        %v1397 = vpop.f32.mrf.mxu0
        %v1398 = vadd.f32 %v1296, %v1397
        %1399 = vmatmul.f32.gmra.mxu0 %v1316
        %v1400 = vpop.f32.mrf.mxu0
        %v1401 = vadd.f32 %v1297, %v1400
        %1402 = vmatmul.f32.gmra.mxu0 %v1318
        %v1403 = vpop.f32.mrf.mxu0
        %v1404 = vadd.f32 %v1298, %v1403
        %1405 = vmatmul.f32.gmra.mxu0 %v1320
        %v1406 = vpop.f32.mrf.mxu0
        %v1407 = vadd.f32 %v1299, %v1406
        %1408 = vmatmul.f32.gmra.mxu0 %v1322
        %v1409 = vpop.f32.mrf.mxu0
        %v1410 = vadd.f32 %v1300, %v1409
        %1411 = vmatmul.f32.gmra.mxu0 %v1324
        %v1412 = vpop.f32.mrf.mxu0
        %v1413 = vadd.f32 %v1301, %v1412
        %1414 = vmatmul.f32.gmra.mxu0 %v1326
        %v1415 = vpop.f32.mrf.mxu0
        %v1416 = vadd.f32 %v1302, %v1415
        %1417 = vmatmul.f32.gmra.mxu0 %v1328
        %v1418 = vpop.f32.mrf.mxu0
        %v1419 = vadd.f32 %v1303, %v1418
        %1420 = vmatmul.f32.gmra.mxu0 %v1330
        %v1421 = vpop.f32.mrf.mxu0
        %v1422 = vadd.f32 %v1304, %v1421
        %1423 = vmatmul.f32.gmra.mxu0 %v1332
        %v1424 = vpop.f32.mrf.mxu0
        %v1425 = vadd.f32 %v1305, %v1424
        %1426 = vmatmul.f32.gmra.mxu0 %v1334
        %v1427 = vpop.f32.mrf.mxu0
        %v1428 = vadd.f32 %v1306, %v1427
        %1429 = vmatmul.f32.gmra.mxu0 %v1336
        %v1430 = vpop.f32.mrf.mxu0
        %v1431 = vadd.f32 %v1307, %v1430
        %1432 = vmatmul.f32.gmra.mxu0 %v1338
        %v1433 = vpop.f32.mrf.mxu0
        %v1434 = vadd.f32 %v1308, %v1433
        %1435 = vmatmul.f32.gmra.mxu0 %v1340
        %v1436 = vpop.f32.mrf.mxu0
        %v1437 = vadd.f32 %v1309, %v1436
        %1438 = vdwg.mxu0
        %1439 = vmatpush.msra.mxu0 %v1373
        %1440 = vmatpush.msra.mxu0 %v1372
        %1441 = vmatpush.msra.mxu0 %v1371
        %1442 = vmatpush.msra.mxu0 %v1370
        %1443 = vmatpush.msra.mxu0 %v1369
        %1444 = vmatpush.msra.mxu0 %v1368
        %1445 = vmatpush.msra.mxu0 %v1367
        %1446 = vmatpush.msra.mxu0 %v1366
        %1447 = vmatpush.msra.mxu0 %v1365
        %1448 = vmatpush.msra.mxu0 %v1364
        %1449 = vmatpush.msra.mxu0 %v1363
        %1450 = vmatpush.msra.mxu0 %v1362
        %1451 = vmatpush.msra.mxu0 %v1361
        %1452 = vmatpush.msra.mxu0 %v1360
        %1453 = vmatpush.msra.mxu0 %v1359
        %1454 = vmatpush.msra.mxu0 %v1358
        %1455 = vmatmul.f32.gmra.mxu0 %v1311
        %v1456 = vpop.f32.mrf.mxu0
        %v1457 = vadd.f32 %v1392, %v1456
        %1458 = vmatmul.f32.gmra.mxu0 %v1313
        %v1459 = vpop.f32.mrf.mxu0
        %v1460 = vadd.f32 %v1395, %v1459
        %1461 = vmatmul.f32.gmra.mxu0 %v1315
        %v1462 = vpop.f32.mrf.mxu0
        %v1463 = vadd.f32 %v1398, %v1462
        %1464 = vmatmul.f32.gmra.mxu0 %v1317
        %v1465 = vpop.f32.mrf.mxu0
        %v1466 = vadd.f32 %v1401, %v1465
        %1467 = vmatmul.f32.gmra.mxu0 %v1319
        %v1468 = vpop.f32.mrf.mxu0
        %v1469 = vadd.f32 %v1404, %v1468
        %1470 = vmatmul.f32.gmra.mxu0 %v1321
        %v1471 = vpop.f32.mrf.mxu0
        %v1472 = vadd.f32 %v1407, %v1471
        %1473 = vmatmul.f32.gmra.mxu0 %v1323
        %v1474 = vpop.f32.mrf.mxu0
        %v1475 = vadd.f32 %v1410, %v1474
        %1476 = vmatmul.f32.gmra.mxu0 %v1325
        %v1477 = vpop.f32.mrf.mxu0
        %v1478 = vadd.f32 %v1413, %v1477
        %1479 = vmatmul.f32.gmra.mxu0 %v1327
        %v1480 = vpop.f32.mrf.mxu0
        %v1481 = vadd.f32 %v1416, %v1480
        %1482 = vmatmul.f32.gmra.mxu0 %v1329
        %v1483 = vpop.f32.mrf.mxu0
        %v1484 = vadd.f32 %v1419, %v1483
        %1485 = vmatmul.f32.gmra.mxu0 %v1331
        %v1486 = vpop.f32.mrf.mxu0
        %v1487 = vadd.f32 %v1422, %v1486
        %1488 = vmatmul.f32.gmra.mxu0 %v1333
        %v1489 = vpop.f32.mrf.mxu0
        %v1490 = vadd.f32 %v1425, %v1489
        %1491 = vmatmul.f32.gmra.mxu0 %v1335
        %v1492 = vpop.f32.mrf.mxu0
        %v1493 = vadd.f32 %v1428, %v1492
        %1494 = vmatmul.f32.gmra.mxu0 %v1337
        %v1495 = vpop.f32.mrf.mxu0
        %v1496 = vadd.f32 %v1431, %v1495
        %1497 = vmatmul.f32.gmra.mxu0 %v1339
        %v1498 = vpop.f32.mrf.mxu0
        %v1499 = vadd.f32 %v1434, %v1498
        %1500 = vmatmul.f32.gmra.mxu0 %v1341
        %v1501 = vpop.f32.mrf.mxu0
        %v1502 = vadd.f32 %v1437, %v1501
        %1503 = vdwg.mxu0
        %v1504 = vld [vmem:[%s7] sm:$0x1]
        %v1506 = vperm.slane %v1504, 0
        %v1508 = vadd.f32 %v1457, %v1506
        %v1509 = vadd.f32 %v1460, %v1506
        %v1510 = vadd.f32 %v1463, %v1506
        %v1511 = vadd.f32 %v1466, %v1506
        %v1512 = vadd.f32 %v1469, %v1506
        %v1513 = vadd.f32 %v1472, %v1506
        %v1514 = vadd.f32 %v1475, %v1506
        %v1515 = vadd.f32 %v1478, %v1506
        %v1516 = vadd.f32 %v1481, %v1506
        %v1517 = vadd.f32 %v1484, %v1506
        %v1518 = vadd.f32 %v1487, %v1506
        %v1519 = vadd.f32 %v1490, %v1506
        %v1520 = vadd.f32 %v1493, %v1506
        %v1521 = vadd.f32 %v1496, %v1506
        %v1522 = vadd.f32 %v1499, %v1506
        %v1523 = vadd.f32 %v1502, %v1506
        %1524 = vmax.xlane.f32.xlu0 %v1508
        %v1525 = vpop.xlane.xlu0 %1524
        %1526 = vmax.xlane.f32.xlu0 %v1509
        %v1527 = vpop.xlane.xlu0 %1526
        %1528 = vmax.xlane.f32.xlu0 %v1510
        %v1529 = vpop.xlane.xlu0 %1528
        %1530 = vmax.xlane.f32.xlu0 %v1511
        %v1531 = vpop.xlane.xlu0 %1530
        %1532 = vmax.xlane.f32.xlu0 %v1512
        %v1533 = vpop.xlane.xlu0 %1532
        %1534 = vmax.xlane.f32.xlu0 %v1513
        %v1535 = vpop.xlane.xlu0 %1534
        %1536 = vmax.xlane.f32.xlu0 %v1514
        %v1537 = vpop.xlane.xlu0 %1536
        %1538 = vmax.xlane.f32.xlu0 %v1515
        %v1539 = vpop.xlane.xlu0 %1538
        %1540 = vmax.xlane.f32.xlu0 %v1516
        %v1541 = vpop.xlane.xlu0 %1540
        %1542 = vmax.xlane.f32.xlu0 %v1517
        %v1543 = vpop.xlane.xlu0 %1542
        %1544 = vmax.xlane.f32.xlu0 %v1518
        %v1545 = vpop.xlane.xlu0 %1544
        %1546 = vmax.xlane.f32.xlu0 %v1519
        %v1547 = vpop.xlane.xlu0 %1546
        %1548 = vmax.xlane.f32.xlu0 %v1520
        %v1549 = vpop.xlane.xlu0 %1548
        %1550 = vmax.xlane.f32.xlu0 %v1521
        %v1551 = vpop.xlane.xlu0 %1550
        %1552 = vmax.xlane.f32.xlu0 %v1522
        %v1553 = vpop.xlane.xlu0 %1552
        %1554 = vmax.xlane.f32.xlu0 %v1523
        %v1555 = vpop.xlane.xlu0 %1554
        %v1556 = vsub.f32 %v1508, %v1525
        %v1557 = vsub.f32 %v1509, %v1527
        %v1558 = vsub.f32 %v1510, %v1529
        %v1559 = vsub.f32 %v1511, %v1531
        %v1560 = vsub.f32 %v1512, %v1533
        %v1561 = vsub.f32 %v1513, %v1535
        %v1562 = vsub.f32 %v1514, %v1537
        %v1563 = vsub.f32 %v1515, %v1539
        %v1564 = vsub.f32 %v1516, %v1541
        %v1565 = vsub.f32 %v1517, %v1543
        %v1566 = vsub.f32 %v1518, %v1545
        %v1567 = vsub.f32 %v1519, %v1547
        %v1568 = vsub.f32 %v1520, %v1549
        %v1569 = vsub.f32 %v1521, %v1551
        %v1570 = vsub.f32 %v1522, %v1553
        %v1571 = vsub.f32 %v1523, %v1555
        %v1572 = vmul.f32 %v1556, 1.442695
        %v1573 = vpow.pop %v1572
        %v1574 = vmul.f32 %v1557, 1.442695
        %v1575 = vpow.pop %v1574
        %v1576 = vmul.f32 %v1558, 1.442695
        %v1577 = vpow.pop %v1576
        %v1578 = vmul.f32 %v1559, 1.442695
        %v1579 = vpow.pop %v1578
        %v1580 = vmul.f32 %v1560, 1.442695
        %v1581 = vpow.pop %v1580
        %v1582 = vmul.f32 %v1561, 1.442695
        %v1583 = vpow.pop %v1582
        %v1584 = vmul.f32 %v1562, 1.442695
        %v1585 = vpow.pop %v1584
        %v1586 = vmul.f32 %v1563, 1.442695
        %v1587 = vpow.pop %v1586
        %v1588 = vmul.f32 %v1564, 1.442695
        %v1589 = vpow.pop %v1588
        %v1590 = vmul.f32 %v1565, 1.442695
        %v1591 = vpow.pop %v1590
        %v1592 = vmul.f32 %v1566, 1.442695
        %v1593 = vpow.pop %v1592
        %v1594 = vmul.f32 %v1567, 1.442695
        %v1595 = vpow.pop %v1594
        %v1596 = vmul.f32 %v1568, 1.442695
        %v1597 = vpow.pop %v1596
        %v1598 = vmul.f32 %v1569, 1.442695
        %v1599 = vpow.pop %v1598
        %v1600 = vmul.f32 %v1570, 1.442695
        %v1601 = vpow.pop %v1600
        %v1602 = vmul.f32 %v1571, 1.442695
        %v1603 = vpow.pop %v1602
        %1604 = vadd.xlane.f32.xlu0 %v1573
        %v1605 = vpop.xlane.xlu0 %1604
        %1606 = vadd.xlane.f32.xlu0 %v1575
        %v1607 = vpop.xlane.xlu0 %1606
        %1608 = vadd.xlane.f32.xlu0 %v1577
        %v1609 = vpop.xlane.xlu0 %1608
        %1610 = vadd.xlane.f32.xlu0 %v1579
        %v1611 = vpop.xlane.xlu0 %1610
        %1612 = vadd.xlane.f32.xlu0 %v1581
        %v1613 = vpop.xlane.xlu0 %1612
        %1614 = vadd.xlane.f32.xlu0 %v1583
        %v1615 = vpop.xlane.xlu0 %1614
        %1616 = vadd.xlane.f32.xlu0 %v1585
        %v1617 = vpop.xlane.xlu0 %1616
        %1618 = vadd.xlane.f32.xlu0 %v1587
        %v1619 = vpop.xlane.xlu0 %1618
        %1620 = vadd.xlane.f32.xlu0 %v1589
        %v1621 = vpop.xlane.xlu0 %1620
        %1622 = vadd.xlane.f32.xlu0 %v1591
        %v1623 = vpop.xlane.xlu0 %1622
        %1624 = vadd.xlane.f32.xlu0 %v1593
        %v1625 = vpop.xlane.xlu0 %1624
        %1626 = vadd.xlane.f32.xlu0 %v1595
        %v1627 = vpop.xlane.xlu0 %1626
        %1628 = vadd.xlane.f32.xlu0 %v1597
        %v1629 = vpop.xlane.xlu0 %1628
        %1630 = vadd.xlane.f32.xlu0 %v1599
        %v1631 = vpop.xlane.xlu0 %1630
        %1632 = vadd.xlane.f32.xlu0 %v1601
        %v1633 = vpop.xlane.xlu0 %1632
        %1634 = vadd.xlane.f32.xlu0 %v1603
        %v1635 = vpop.xlane.xlu0 %1634
        %v1636 = vrcp.pop %v1605
        %v1637 = vrcp.pop %v1607
        %v1638 = vrcp.pop %v1609
        %v1639 = vrcp.pop %v1611
        %v1640 = vrcp.pop %v1613
        %v1641 = vrcp.pop %v1615
        %v1642 = vrcp.pop %v1617
        %v1643 = vrcp.pop %v1619
        %v1644 = vrcp.pop %v1621
        %v1645 = vrcp.pop %v1623
        %v1646 = vrcp.pop %v1625
        %v1647 = vrcp.pop %v1627
        %v1648 = vrcp.pop %v1629
        %v1649 = vrcp.pop %v1631
        %v1650 = vrcp.pop %v1633
        %v1651 = vrcp.pop %v1635
        %v1652 = vmul.f32 %v1605, %v1636
        %v1653 = vmul.f32 %v1607, %v1637
        %v1654 = vmul.f32 %v1609, %v1638
        %v1655 = vmul.f32 %v1611, %v1639
        %v1656 = vmul.f32 %v1613, %v1640
        %v1657 = vmul.f32 %v1615, %v1641
        %v1658 = vmul.f32 %v1617, %v1642
        %v1659 = vmul.f32 %v1619, %v1643
        %v1660 = vmul.f32 %v1621, %v1644
        %v1661 = vmul.f32 %v1623, %v1645
        %v1662 = vmul.f32 %v1625, %v1646
        %v1663 = vmul.f32 %v1627, %v1647
        %v1664 = vmul.f32 %v1629, %v1648
        %v1665 = vmul.f32 %v1631, %v1649
        %v1666 = vmul.f32 %v1633, %v1650
        %v1667 = vmul.f32 %v1635, %v1651
        %v1668 = vsub.f32 2.0, %v1652
        %v1669 = vsub.f32 2.0, %v1653
        %v1670 = vsub.f32 2.0, %v1654
        %v1671 = vsub.f32 2.0, %v1655
        %v1672 = vsub.f32 2.0, %v1656
        %v1673 = vsub.f32 2.0, %v1657
        %v1674 = vsub.f32 2.0, %v1658
        %v1675 = vsub.f32 2.0, %v1659
        %v1676 = vsub.f32 2.0, %v1660
        %v1677 = vsub.f32 2.0, %v1661
        %v1678 = vsub.f32 2.0, %v1662
        %v1679 = vsub.f32 2.0, %v1663
        %v1680 = vsub.f32 2.0, %v1664
        %v1681 = vsub.f32 2.0, %v1665
        %v1682 = vsub.f32 2.0, %v1666
        %v1683 = vsub.f32 2.0, %v1667
        %v1684 = vmul.f32 %v1636, %v1668
        %v1685 = vmul.f32 %v1637, %v1669
        %v1686 = vmul.f32 %v1638, %v1670
        %v1687 = vmul.f32 %v1639, %v1671
        %v1688 = vmul.f32 %v1640, %v1672
        %v1689 = vmul.f32 %v1641, %v1673
        %v1690 = vmul.f32 %v1642, %v1674
        %v1691 = vmul.f32 %v1643, %v1675
        %v1692 = vmul.f32 %v1644, %v1676
        %v1693 = vmul.f32 %v1645, %v1677
        %v1694 = vmul.f32 %v1646, %v1678
        %v1695 = vmul.f32 %v1647, %v1679
        %v1696 = vmul.f32 %v1648, %v1680
        %v1697 = vmul.f32 %v1649, %v1681
        %v1698 = vmul.f32 %v1650, %v1682
        %v1699 = vmul.f32 %v1651, %v1683
        %v1700 = vmul.f32 %v1573, %v1684
        %v1701 = vmul.f32 %v1575, %v1685
        %v1702 = vmul.f32 %v1577, %v1686
        %v1703 = vmul.f32 %v1579, %v1687
        %v1704 = vmul.f32 %v1581, %v1688
        %v1705 = vmul.f32 %v1583, %v1689
        %v1706 = vmul.f32 %v1585, %v1690
        %v1707 = vmul.f32 %v1587, %v1691
        %v1708 = vmul.f32 %v1589, %v1692
        %v1709 = vmul.f32 %v1591, %v1693
        %v1710 = vmul.f32 %v1593, %v1694
        %v1711 = vmul.f32 %v1595, %v1695
        %v1712 = vmul.f32 %v1597, %v1696
        %v1713 = vmul.f32 %v1599, %v1697
        %v1714 = vmul.f32 %v1601, %v1698
        %v1715 = vmul.f32 %v1603, %v1699
        %1716 = vst [vmem:[%s346] sm:$0xff] %v1700
        %1717 = vst [vmem:[%s346 + $0x8] sm:$0xff] %v1701
        %1718 = vst [vmem:[%s346 + $0x10] sm:$0xff] %v1702
        %1719 = vst [vmem:[%s346 + $0x18] sm:$0xff] %v1703
        %1720 = vst [vmem:[%s346 + $0x20] sm:$0xff] %v1704
        %1721 = vst [vmem:[%s346 + $0x28] sm:$0xff] %v1705
        %1722 = vst [vmem:[%s346 + $0x30] sm:$0xff] %v1706
        %1723 = vst [vmem:[%s346 + $0x38] sm:$0xff] %v1707
        %1724 = vst [vmem:[%s346 + $0x40] sm:$0xff] %v1708
        %1725 = vst [vmem:[%s346 + $0x48] sm:$0xff] %v1709
        %1726 = vst [vmem:[%s346 + $0x50] sm:$0xff] %v1710
        %1727 = vst [vmem:[%s346 + $0x58] sm:$0xff] %v1711
        %1728 = vst [vmem:[%s346 + $0x60] sm:$0xff] %v1712
        %1729 = vst [vmem:[%s346 + $0x68] sm:$0xff] %v1713
        %1730 = vst [vmem:[%s346 + $0x70] sm:$0xff] %v1714
        %1731 = vst [vmem:[%s346 + $0x78] sm:$0xff] %v1715
        %v1732 = vlog2.pop %v1605
        %v1733 = vmul.f32 %v1732, 0.6931472
        %v1734 = vlog2.pop %v1607
        %v1735 = vmul.f32 %v1734, 0.6931472
        %v1736 = vlog2.pop %v1609
        %v1737 = vmul.f32 %v1736, 0.6931472
        %v1738 = vlog2.pop %v1611
        %v1739 = vmul.f32 %v1738, 0.6931472
        %v1740 = vlog2.pop %v1613
        %v1741 = vmul.f32 %v1740, 0.6931472
        %v1742 = vlog2.pop %v1615
        %v1743 = vmul.f32 %v1742, 0.6931472
        %v1744 = vlog2.pop %v1617
        %v1745 = vmul.f32 %v1744, 0.6931472
        %v1746 = vlog2.pop %v1619
        %v1747 = vmul.f32 %v1746, 0.6931472
        %v1748 = vlog2.pop %v1621
        %v1749 = vmul.f32 %v1748, 0.6931472
        %v1750 = vlog2.pop %v1623
        %v1751 = vmul.f32 %v1750, 0.6931472
        %v1752 = vlog2.pop %v1625
        %v1753 = vmul.f32 %v1752, 0.6931472
        %v1754 = vlog2.pop %v1627
        %v1755 = vmul.f32 %v1754, 0.6931472
        %v1756 = vlog2.pop %v1629
        %v1757 = vmul.f32 %v1756, 0.6931472
        %v1758 = vlog2.pop %v1631
        %v1759 = vmul.f32 %v1758, 0.6931472
        %v1760 = vlog2.pop %v1633
        %v1761 = vmul.f32 %v1760, 0.6931472
        %v1762 = vlog2.pop %v1635
        %v1763 = vmul.f32 %v1762, 0.6931472
        %v1764 = vadd.f32 %v1525, %v1733
        %v1765 = vadd.f32 %v1527, %v1735
        %v1766 = vadd.f32 %v1529, %v1737
        %v1767 = vadd.f32 %v1531, %v1739
        %v1768 = vadd.f32 %v1533, %v1741
        %v1769 = vadd.f32 %v1535, %v1743
        %v1770 = vadd.f32 %v1537, %v1745
        %v1771 = vadd.f32 %v1539, %v1747
        %v1772 = vadd.f32 %v1541, %v1749
        %v1773 = vadd.f32 %v1543, %v1751
        %v1774 = vadd.f32 %v1545, %v1753
        %v1775 = vadd.f32 %v1547, %v1755
        %v1776 = vadd.f32 %v1549, %v1757
        %v1777 = vadd.f32 %v1551, %v1759
        %v1778 = vadd.f32 %v1553, %v1761
        %v1779 = vadd.f32 %v1555, %v1763
        %v1780 = vsub.f32 %v1508, %v1764
        %v1781 = vsub.f32 %v1509, %v1765
        %v1782 = vsub.f32 %v1510, %v1766
        %v1783 = vsub.f32 %v1511, %v1767
        %v1784 = vsub.f32 %v1512, %v1768
        %v1785 = vsub.f32 %v1513, %v1769
        %v1786 = vsub.f32 %v1514, %v1770
        %v1787 = vsub.f32 %v1515, %v1771
        %v1788 = vsub.f32 %v1516, %v1772
        %v1789 = vsub.f32 %v1517, %v1773
        %v1790 = vsub.f32 %v1518, %v1774
        %v1791 = vsub.f32 %v1519, %v1775
        %v1792 = vsub.f32 %v1520, %v1776
        %v1793 = vsub.f32 %v1521, %v1777
        %v1794 = vsub.f32 %v1522, %v1778
        %v1795 = vsub.f32 %v1523, %v1779
        %1796 = vst [vmem:[%s353] sm:$0xff] %v1780
        %1797 = vst [vmem:[%s353 + $0x8] sm:$0xff] %v1781
        %1798 = vst [vmem:[%s353 + $0x10] sm:$0xff] %v1782
        %1799 = vst [vmem:[%s353 + $0x18] sm:$0xff] %v1783
        %1800 = vst [vmem:[%s353 + $0x20] sm:$0xff] %v1784
        %1801 = vst [vmem:[%s353 + $0x28] sm:$0xff] %v1785
        %1802 = vst [vmem:[%s353 + $0x30] sm:$0xff] %v1786
        %1803 = vst [vmem:[%s353 + $0x38] sm:$0xff] %v1787
        %1804 = vst [vmem:[%s353 + $0x40] sm:$0xff] %v1788
        %1805 = vst [vmem:[%s353 + $0x48] sm:$0xff] %v1789
        %1806 = vst [vmem:[%s353 + $0x50] sm:$0xff] %v1790
        %1807 = vst [vmem:[%s353 + $0x58] sm:$0xff] %v1791
        %1808 = vst [vmem:[%s353 + $0x60] sm:$0xff] %v1792
        %1809 = vst [vmem:[%s353 + $0x68] sm:$0xff] %v1793
        %1810 = vst [vmem:[%s353 + $0x70] sm:$0xff] %v1794
        %1811 = vst [vmem:[%s353 + $0x78] sm:$0xff] %v1795
        %s1812 = sand.u32 %s213, 1
        %s1813 = scalar_lea.sflag [#allocation3], %s1812
        %s1814 = sand.u32 %s213, 1
        %s1815 = smul.addr %s1814, 128
        %s1816 = scalar_lea.vmem [#allocation2], %s1815
        %s1817 = sand.u32 %s239, 1
        %s1818 = scalar_lea.sflag [#allocation5], %s1817
        %s1819 = sand.u32 %s239, 1
        %s1820 = smul.addr %s1819, 128
        %s1821 = scalar_lea.vmem [#allocation4], %s1820
        // Predicated region
        $region53: #{tpu_custom_call.1} parent=51 // pred_check
          %p1822 = pneg %p223
        $region54: #{tpu_custom_call.1} parent=51 // pred_check_branch
          %1824 = sbr.rel (%p1822) target = $region56
        $region55: #{tpu_custom_call.1} parent=51 // pred_region
          %s1825 = smul.u32 16, %s27
          %1827 = vsyncadd %s1813, 0
          %s1828 = smul.addr %s1825, 8
          %s1829 = scalar_lea.hbm %s8, %s1828
          %s1830 = sshll.u32 %s1816, 4
          %s1831 = int_to_ptr.vmem [resolvable:$true] %s1830
          %s1832 = sshll.u32 %s1829, 4
          %s1833 = int_to_ptr.hbm [resolvable:$true] %s1832
          %1838 = dma.vmem_to_hbm [thread:$0]  %s1831, 2048, %s1833, %s1813, 128, 128, 8
        $region56: #{tpu_custom_call.1} parent=51 // pred_fallthru
          _
        // Predicated region
        $region57: #{tpu_custom_call.1} parent=51 // pred_check
          %p1839 = pneg %p249
        $region58: #{tpu_custom_call.1} parent=51 // pred_check_branch
          %1841 = sbr.rel (%p1839) target = $region60
        $region59: #{tpu_custom_call.1} parent=51 // pred_region
          %s1842 = smul.u32 16, %s27
          %1844 = vsyncadd %s1818, 0
          %s1845 = smul.addr %s1842, 8
          %s1846 = scalar_lea.hbm %s9, %s1845
          %s1847 = sshll.u32 %s1821, 4
          %s1848 = int_to_ptr.vmem [resolvable:$true] %s1847
          %s1849 = sshll.u32 %s1846, 4
          %s1850 = int_to_ptr.hbm [resolvable:$true] %s1849
          %1855 = dma.vmem_to_hbm [thread:$0]  %s1848, 2048, %s1850, %s1818, 128, 128, 8
        $region60: #{tpu_custom_call.1} parent=51 // pred_fallthru
          _
      $region52: #{tpu_custom_call.1} parent=5 // pred_fallthru
        _
      %p1856 = scmp.le.s32.totalorder 2, %s22
      // Predicated region
      $region61: #{tpu_custom_call.1} parent=5 // pred_check
        %p1857 = pneg %p1856
      $region62: #{tpu_custom_call.1} parent=5 // pred_check_branch
        %1859 = sbr.rel (%p1857) target = $region64
      $region63: #{tpu_custom_call.1} parent=5 // pred_region
        %s1860 = ssub.s32 %s22, 2
        // Predicated region
        $region65: #{tpu_custom_call.1} parent=63 // pred_check
          %p1861 = pneg %p229
        $region66: #{tpu_custom_call.1} parent=63 // pred_check_branch
          %1863 = sbr.rel (%p1861) target = $region68
        $region67: #{tpu_custom_call.1} parent=63 // pred_region
          %s1864 = sand.u32 %s214, 1
          %s1865 = scalar_lea.sflag [#allocation3], %s1864
          %s1866 = sand.u32 %s214, 1
          %s1867 = smul.addr %s1866, 128
          %s1868 = scalar_lea.vmem [#allocation2], %s1867
          %1870 = dma.done %s1865, 2048
        $region68: #{tpu_custom_call.1} parent=63 // pred_fallthru
          _
        // Predicated region
        $region69: #{tpu_custom_call.1} parent=63 // pred_check
          %p1871 = pneg %p255
        $region70: #{tpu_custom_call.1} parent=63 // pred_check_branch
          %1873 = sbr.rel (%p1871) target = $region72
        $region71: #{tpu_custom_call.1} parent=63 // pred_region
          %s1874 = sand.u32 %s240, 1
          %s1875 = scalar_lea.sflag [#allocation5], %s1874
          %s1876 = sand.u32 %s240, 1
          %s1877 = smul.addr %s1876, 128
          %s1878 = scalar_lea.vmem [#allocation4], %s1877
          %1880 = dma.done %s1875, 2048
        $region72: #{tpu_custom_call.1} parent=63 // pred_fallthru
          _
      $region64: #{tpu_custom_call.1} parent=5 // pred_fallthru
        _
    $region6: #{tpu_custom_call.1} parent=1 // loop_footer
      %s26 = sadd.s32 1, %s22
    $region7: #{tpu_custom_call.1} parent=1 // loop_footer_branch
      %21 = sbr.rel target = $region3
    $region8: #{tpu_custom_call.1} parent=1 // loop_exit
      _
    %1881 = vsyncpa [#allocation3], 1
    %s1882 = scalar_lea.sflag [#allocation3], 1
    %1883 = vsyncpa %s1882, 1
    %1884 = vsyncpa [#allocation5], 1
    %s1885 = scalar_lea.sflag [#allocation5], 1
    %1886 = vsyncpa %s1885, 1

</llo_original>
